<compile_context>
chip_gen: v7x
topology: tpu7x:2x2x1
jax: 0.10.0
libtpu: 0.0.40
codegen_flags: <defaults>
</compile_context>

<pallas_src>
import jax
import jax.numpy as jnp
from jax.experimental import pallas as pl
from jax.experimental.pallas import tpu as pltpu


def cmt_kernel(q_ref, k_ref, mask_ref, w_ref, out_ref):
    """One block of B_blk batch elements per grid step.

    q_ref, k_ref : (B_blk, C, H*W)  query / key, NCHW flattened (lane-dense).
    mask_ref     : (4, H*W)         1.0 where the flat position belongs to patch p.
    w_ref        : (C+1, C+1)       packed fused weights:
                     rows 0..C-1 : [ (wk^T wq)/64 | (bq @ wk)/64 ]
                     row  C      : [  bk @ wq     |  bq . bk     ]
    out_ref      : (B_blk, C, H*W)  gated query values, same layout as input.
    """
    bb, C, HW = q_ref.shape
    hp = jax.lax.Precision.HIGHEST

    mask = mask_ref[...]              # (4, HW)
    w = w_ref[...]                    # (C+1, C+1)
    w_top = w[0:C, :]                 # (C, C+1)
    w_bot = w[C:C + 1, :]             # (1, C+1)

    for b in range(bb):
        q = q_ref[b]                  # (C, HW)
        k = k_ref[b]                  # (C, HW)

        # Per-patch key sums on the MXU: ksum4[p, c] = sum_{pos in patch p} k[c, pos]
        ksum4 = jax.lax.dot_general(
            mask, k, (((1,), (1,)), ((), ())),
            precision=hp, preferred_element_type=jnp.float32)        # (4, C)

        # Fused 1x1-conv / mean / bias coefficients for all 4 patches at once.
        vs = jnp.dot(ksum4, w_top, precision=hp,
                     preferred_element_type=jnp.float32) + w_bot      # (4, C+1)
        v4 = vs[:, 0:C]               # (4, C)  per-patch channel weights
        s4 = vs[:, C:C + 1]           # (4, 1)  per-patch scalar offsets

        # Relevance of every image position against every patch (MXU), then
        # select each position's own patch, gate, and store immediately.
        rel_all = jnp.dot(v4, q, precision=hp,
                          preferred_element_type=jnp.float32)         # (4, HW)
        rel = jnp.sum(mask * (rel_all + s4), axis=0, keepdims=True)   # (1, HW)
        irr = 1.0 - jax.nn.sigmoid(rel)                               # (1, HW) EUP
        out_ref[b] = irr * q                                          # (C, HW)


def _pick_batch_block(B):
    """Largest divisor of B in {8,4,2} that still leaves >=2 grid steps."""
    if B <= 1:
        return 1
    for bb in (8, 4, 2):
        if B % bb == 0 and B // bb >= 2:
            return bb
    return 1


def cmt_forward(query, key, wq, bq, wk, bk, batch_block=None):
    """query, key: (B, 32, H, W) float32 NCHW.  Returns (B, 32, H, W)."""
    B, C, H, W = query.shape
    P = H // 2
    HW = H * W
    hp = jax.lax.Precision.HIGHEST
    bb = batch_block if batch_block is not None else _pick_batch_block(B)
    assert B % bb == 0

    # Zero-copy lane-dense views of the NCHW inputs (no transpose, no copy).
    q_flat = query.reshape(B, C, HW)
    k_flat = key.reshape(B, C, HW)

    # Patch-membership mask: mask[p, h*W + w] = 1 iff (h//P)*2 + (w//P) == p.
    h_patch = jnp.arange(H) // P
    w_patch = jnp.arange(W) // P
    pmap = (h_patch[:, None] * 2 + w_patch[None, :]).reshape(-1)          # (HW,)
    mask = (pmap[None, :] == jnp.arange(4)[:, None]).astype(jnp.float32)  # (4, HW)

    # Weight-only precompute: both 1x1 convs, the 1/(P*P) mean factor and all
    # bias terms fold into one (C+1, C+1) matrix.
    inv_n = 1.0 / float(P * P)
    a_mat = jnp.dot(wk.T, wq, precision=hp) * inv_n                       # (C, C)
    u_col = (jnp.dot(bq, wk, precision=hp) * inv_n).reshape(C, 1)         # (C, 1)
    bv_row = jnp.dot(bk, wq, precision=hp).reshape(1, C)                  # (1, C)
    s0 = jnp.dot(bq, bk, precision=hp).reshape(1, 1)                      # (1, 1)
    w_pk = jnp.concatenate(
        [jnp.concatenate([a_mat, u_col], axis=1),
         jnp.concatenate([bv_row, s0], axis=1)], axis=0)                  # (C+1, C+1)

    gated = pl.pallas_call(
        cmt_kernel,
        out_shape=jax.ShapeDtypeStruct((B, C, HW), jnp.float32),
        grid=(B // bb,),
        in_specs=[
            pl.BlockSpec((bb, C, HW), lambda i: (i, 0, 0)),
            pl.BlockSpec((bb, C, HW), lambda i: (i, 0, 0)),
            pl.BlockSpec((4, HW), lambda i: (0, 0)),
            pl.BlockSpec((C + 1, C + 1), lambda i: (0, 0)),
        ],
        out_specs=pl.BlockSpec((bb, C, HW), lambda i: (i, 0, 0)),
        compiler_params=pltpu.CompilerParams(
            dimension_semantics=("parallel",)),
    )(q_flat, k_flat, mask, w_pk)

    # Torch-faithful reassembly (mirrors the module's view/permute chain):
    #   out[b, 16*i + 8*j + c//4, 2*(w%P) + (c%4)//2, 2*(h%P) + c%2]
    #     = gated[b, c, h, w]   with i = h//P, j = w//P.
    # Single XLA transpose — the only wrapper-side data movement.
    gated = gated.reshape(B, C, H, W)
    g8 = gated.reshape(B, C // 4, 2, 2, 2, P, 2, P)    # [b, c4, cA, cB, i, v, j, u]
    out = jnp.transpose(g8, (0, 4, 6, 1, 7, 2, 5, 3))  # [b, i, j, c4, u, cA, v, cB]
    return out.reshape(B, C, H, W)


def cmt_reference(query, key, wq, bq, wk, bk):
    """Pure-JAX mirror of the PyTorch forward (for correctness check)."""
    B, C, H, W = query.shape
    P = H // 2
    hp = jax.lax.Precision.HIGHEST

    def conv1x1(x, w, b):
        return jnp.einsum('oc,bchw->bohw', w, x, precision=hp) + b[None, :, None, None]

    spa_q = conv1x1(query, wq, bq)
    spa_k = conv1x1(key, wk, bk)

    def image_to_patches(img):
        x = img.reshape(B, C, 2, P, 2, P)
        x = jnp.transpose(x, (0, 1, 2, 4, 3, 5))    # unfold + unfold
        x = jnp.transpose(x, (0, 1, 2, 3, 5, 4))    # permute(0,1,2,3,5,4)
        return x.reshape(B, C, 4, P, P)

    before_q_p = jnp.transpose(image_to_patches(query), (0, 2, 1, 3, 4))
    spa_q_p = jnp.transpose(image_to_patches(spa_q), (0, 2, 1, 3, 4))
    spa_k_p = jnp.transpose(image_to_patches(spa_k), (0, 2, 1, 3, 4)).reshape(B, 4, C, P * P)
    spa_k_mean = jnp.mean(spa_k_p, axis=3, keepdims=True)        # (B, 4, C, 1)

    vals = []
    for p in range(4):
        km_t = jnp.transpose(spa_k_mean[:, p], (0, 2, 1))        # (B, 1, C)
        qp = spa_q_p[:, p].reshape(B, C, P * P)
        rel = jnp.einsum('bic,bcm->bim', km_t, qp, precision=hp)
        irr = (1.0 - jax.nn.sigmoid(rel)).reshape(B, 1, P, P)
        vals.append(irr * before_q_p[:, p])
    iv = jnp.concatenate(vals, axis=1)                           # (B, 4C, P, P)
    t = iv.reshape(B, C, 2, 2, P, P)
    t = jnp.transpose(t, (0, 1, 4, 2, 5, 3))
    return t.reshape(B, C, 2 * P, 2 * P)


if __name__ == "__main__":
    B, C, H, W = 2, 32, 16, 16   # in_channels=32 is fixed by the module
    k0 = jax.random.PRNGKey(0)
    kq, kk, kwq, kbq, kwk, kbk = jax.random.split(k0, 6)

    query = jax.random.normal(kq, (B, C, H, W), dtype=jnp.float32)
    key_in = jax.random.normal(kk, (B, C, H, W), dtype=jnp.float32)
    scale = 1.0 / jnp.sqrt(jnp.float32(C))
    wq = jax.random.normal(kwq, (C, C), dtype=jnp.float32) * scale   # Conv2d(32,32,1) weight
    bq = jax.random.normal(kbq, (C,), dtype=jnp.float32) * 0.1
    wk = jax.random.normal(kwk, (C, C), dtype=jnp.float32) * scale
    bk = jax.random.normal(kbk, (C,), dtype=jnp.float32) * 0.1

    out = jax.jit(cmt_forward)(query, key_in, wq, bq, wk, bk)
    out = jax.block_until_ready(out)

    ref = cmt_reference(query, key_in, wq, bq, wk, bk)
    assert out.shape == (B, C, H, W), out.shape
    max_err = float(jnp.max(jnp.abs(out - ref)))
    assert max_err < 1e-3, f"max abs err {max_err}"

    print("KERNEL_OK")
</pallas_src>

<mosaic_0001>
module attributes {stable_mosaic.version = 11 : i64} {
  func.func @cmt_kernel(%arg0: i32, %arg1: memref<1x32x256xf32, #tpu.memory_space<vmem>>, %arg2: memref<1x32x256xf32, #tpu.memory_space<vmem>>, %arg3: memref<4x256xf32, #tpu.memory_space<vmem>>, %arg4: memref<33x33xf32, #tpu.memory_space<vmem>>, %arg5: memref<1x32x256xf32, #tpu.memory_space<vmem>>) attributes {dimension_semantics = [#tpu.dimension_semantics<parallel>], iteration_bounds = array<i64: 2>, scalar_prefetch = 0 : i64, scratch_operands = 0 : i64, tpu.core_type = #tpu.core_type<tc>, window_params = [{transform_indices = @transform_0, window_bounds = array<i64: 1, 32, 256>}, {transform_indices = @transform_1, window_bounds = array<i64: 1, 32, 256>}, {pipeline_mode = #tpu.pipeline_mode<synchronous>, transform_indices = @transform_2, window_bounds = array<i64: 4, 256>}, {pipeline_mode = #tpu.pipeline_mode<synchronous>, transform_indices = @transform_3, window_bounds = array<i64: 33, 33>}, {transform_indices = @transform_4, window_bounds = array<i64: 1, 32, 256>}]} {
    %c0 = arith.constant 0 : index
    %c0_0 = arith.constant 0 : index
    %0 = vector.load %arg3[%c0, %c0_0] : memref<4x256xf32, #tpu.memory_space<vmem>>, vector<4x256xf32>
    %c0_1 = arith.constant 0 : index
    %c0_2 = arith.constant 0 : index
    %1 = vector.load %arg4[%c0_1, %c0_2] : memref<33x33xf32, #tpu.memory_space<vmem>>, vector<33x33xf32>
    %2 = vector.extract_strided_slice %1 {offsets = [0, 0], sizes = [32, 33], strides = [1, 1]} : vector<33x33xf32> to vector<32x33xf32>
    %3 = vector.extract_strided_slice %1 {offsets = [32, 0], sizes = [1, 33], strides = [1, 1]} : vector<33x33xf32> to vector<1x33xf32>
    %c0_3 = arith.constant 0 : index
    %c0_4 = arith.constant 0 : index
    %c0_5 = arith.constant 0 : index
    %4 = vector.load %arg1[%c0_3, %c0_4, %c0_5] : memref<1x32x256xf32, #tpu.memory_space<vmem>>, vector<1x32x256xf32>
    %5 = vector.shape_cast %4 : vector<1x32x256xf32> to vector<32x256xf32>
    %c0_6 = arith.constant 0 : index
    %c0_7 = arith.constant 0 : index
    %c0_8 = arith.constant 0 : index
    %6 = vector.load %arg2[%c0_6, %c0_7, %c0_8] : memref<1x32x256xf32, #tpu.memory_space<vmem>>, vector<1x32x256xf32>
    %7 = vector.shape_cast %6 : vector<1x32x256xf32> to vector<32x256xf32>
    %cst = arith.constant dense<0.000000e+00> : vector<4x32xf32>
    %8 = tpu.matmul %0, %7, %cst {dimension_numbers = #tpu.dot_dimension_numbers<[1], [1], [0], [0], [0, 0, 1, 0], [], []>, precision = #tpu.contract_precision<fp32>} : vector<4x256xf32>, vector<32x256xf32>, vector<4x32xf32> -> vector<4x32xf32>
    %cst_9 = arith.constant dense<0.000000e+00> : vector<4x33xf32>
    %9 = tpu.matmul %8, %2, %cst_9 {dimension_numbers = #tpu.dot_dimension_numbers<[1], [0], [0], [1], [0, 0, 1, 1], [], []>, precision = #tpu.contract_precision<fp32>} : vector<4x32xf32>, vector<32x33xf32>, vector<4x33xf32> -> vector<4x33xf32>
    %10 = vector.broadcast %3 : vector<1x33xf32> to vector<4x33xf32>
    %11 = arith.addf %9, %10 : vector<4x33xf32>
    %12 = vector.extract_strided_slice %11 {offsets = [0, 0], sizes = [4, 32], strides = [1, 1]} : vector<4x33xf32> to vector<4x32xf32>
    %13 = vector.extract_strided_slice %11 {offsets = [0, 32], sizes = [4, 1], strides = [1, 1]} : vector<4x33xf32> to vector<4x1xf32>
    %cst_10 = arith.constant dense<0.000000e+00> : vector<4x256xf32>
    %14 = tpu.matmul %12, %5, %cst_10 {dimension_numbers = #tpu.dot_dimension_numbers<[1], [0], [0], [1], [0, 0, 1, 1], [], []>, precision = #tpu.contract_precision<fp32>} : vector<4x32xf32>, vector<32x256xf32>, vector<4x256xf32> -> vector<4x256xf32>
    %15 = vector.broadcast %13 : vector<4x1xf32> to vector<4x256xf32>
    %16 = arith.addf %14, %15 : vector<4x256xf32>
    %17 = arith.mulf %0, %16 : vector<4x256xf32>
    %cst_11 = arith.constant dense<0.000000e+00> : vector<256xf32>
    %18 = vector.multi_reduction <add>, %17, %cst_11 [0] : vector<4x256xf32> to vector<256xf32>
    %19 = vector.shape_cast %18 : vector<256xf32> to vector<1x256xf32>
    %20 = arith.negf %19 : vector<1x256xf32>
    %21 = math.exp %20 : vector<1x256xf32>
    %cst_12 = arith.constant 1.000000e+00 : f32
    %22 = vector.broadcast %cst_12 : f32 to vector<1x256xf32>
    %23 = arith.addf %22, %21 : vector<1x256xf32>
    %24 = arith.divf %22, %23 : vector<1x256xf32>
    %cst_13 = arith.constant 1.000000e+00 : f32
    %25 = vector.broadcast %cst_13 : f32 to vector<1x256xf32>
    %26 = arith.subf %25, %24 : vector<1x256xf32>
    %27 = vector.broadcast %26 : vector<1x256xf32> to vector<32x256xf32>
    %28 = arith.mulf %27, %5 : vector<32x256xf32>
    %c0_14 = arith.constant 0 : index
    %c0_15 = arith.constant 0 : index
    %c0_16 = arith.constant 0 : index
    %29 = vector.load %arg5[%c0_14, %c0_15, %c0_16] : memref<1x32x256xf32, #tpu.memory_space<vmem>>, vector<1x32x256xf32>
    %30 = vector.shape_cast %29 : vector<1x32x256xf32> to vector<32x256xf32>
    %31 = vector.shape_cast %28 : vector<32x256xf32> to vector<1x32x256xf32>
    tpu.vector_store %arg5[%c0_14, %c0_15, %c0_16], %31 {strides = array<i32>} : memref<1x32x256xf32, #tpu.memory_space<vmem>>, vector<1x32x256xf32>,
    return
  }
  func.func @transform_0(%arg0: i32) -> (i32, i32, i32) {
    %c0_i32 = arith.constant 0 : i32
    %c0_i32_0 = arith.constant 0 : i32
    %c0_i32_1 = arith.constant 0 : i32
    return %arg0, %c0_i32, %c0_i32_0 : i32, i32, i32
  }
  func.func @transform_1(%arg0: i32) -> (i32, i32, i32) {
    %c0_i32 = arith.constant 0 : i32
    %c0_i32_0 = arith.constant 0 : i32
    %c0_i32_1 = arith.constant 0 : i32
    return %arg0, %c0_i32, %c0_i32_0 : i32, i32, i32
  }
  func.func @transform_2(%arg0: i32) -> (i32, i32) {
    %c0_i32 = arith.constant 0 : i32
    %c0_i32_0 = arith.constant 0 : i32
    %c0_i32_1 = arith.constant 0 : i32
    return %c0_i32, %c0_i32_0 : i32, i32
  }
  func.func @transform_3(%arg0: i32) -> (i32, i32) {
    %c0_i32 = arith.constant 0 : i32
    %c0_i32_0 = arith.constant 0 : i32
    %c0_i32_1 = arith.constant 0 : i32
    return %c0_i32, %c0_i32_0 : i32, i32
  }
  func.func @transform_4(%arg0: i32) -> (i32, i32, i32) {
    %c0_i32 = arith.constant 0 : i32
    %c0_i32_0 = arith.constant 0 : i32
    %c0_i32_1 = arith.constant 0 : i32
    return %arg0, %c0_i32, %c0_i32_0 : i32, i32, i32
  }
}

</mosaic_0001>

<llo_original>
// kernel: cmt_forward.1
$region0: #{cmt_forward.1}
  #allocation0 [shape = 'u32[]', space=smem, size = 0x4, offset = 0x4, fixed_abs, tag = 'smem constant byte address 0x4 - core index']
  #allocation1 [shape = 'u32[144,128]{1,0:T(1,128)}', space=vmem, size = 0x12000, scoped, tag = 'internal scratch']
  %s0 = inlined_call_operand.vmem [shape: f32[2,32,256], index: 0, kind: input, shape index: {}]
  %s1 = inlined_call_operand.vmem [shape: f32[2,32,256], index: 1, kind: input, shape index: {}]
  %s2 = inlined_call_operand.vmem [shape: f32[4,256], index: 2, kind: input, shape index: {}]
  %s3 = inlined_call_operand.vmem [shape: f32[33,33], index: 3, kind: input, shape index: {}]
  %s4 = inlined_call_operand.vmem [shape: f32[2,32,256], index: 4, kind: output, shape index: {}]
  %s5 = sld [smem:[#allocation0]]
  $region49: #{cmt_forward.1} parent=0
    _
  %s7 = ssub.s32 1, %s5
  %s8 = scalar_select 0, %s7, %s5
  loop: start=0, step=1, limit=4
  $region2: #{cmt_forward.1} parent=0 // loop_pre_header
    _
  $region3: #{cmt_forward.1} parent=0 // loop_header
    %s10 = sphi 0, %s14
    %p11 = scmp.ge.s32.totalorder %s10, 4
    %s20 = sphi 0, %s22
    %s23 = sphi 0, %s20
    %s24 = sphi 0, %s23
    %s40 = sphi 0, %s24
    %s46 = sphi 0, %s48
    %s49 = sphi 0, %s46
    %s50 = sphi 0, %s49
    %s66 = sphi 0, %s50
    %s70 = sphi 0, %s70
    %s72 = sphi 0, %s70
    %s73 = sphi 0, %s72
    %s87 = sphi 0, %s73
    %s91 = sphi 0, %s91
    %s93 = sphi 0, %s91
    %s94 = sphi 0, %s93
    %s108 = sphi 0, %s94
    %s114 = sphi 0, %s116
    %s117 = sphi 0, %s114
    %s118 = sphi 0, %s117
    %s134 = sphi 0, %s118
  $region4: #{cmt_forward.1} parent=0 // loop_header_branch
    %13 = sbr.rel (%p11) target = $region8
  $region5: #{cmt_forward.1} parent=0 // loop_body
    %s15 = ssub.s32 %s10, 1
    %s16 = ssub.s32 %s10, 2
    %s17 = sadd.s32 %s10, 1
    %s18 = ssub.s32 %s10, %s17
    %p19 = scmp.eq.s32.totalorder %s18, 0
    %s21 = sadd.s32 %s20, 1
    %s22 = scalar_select %p19, %s20, %s21
    %p25 = pneg %p19
    %p26 = scmp.eq.s32.totalorder %s10, 1
    %p27 = por %p25, %p26
    %p28 = scmp.ne.s32.totalorder %s20, %s23
    %p29 = scmp.eq.s32.totalorder %s10, 0
    %p30 = por %p28, %p29
    %p31 = scmp.ne.s32.totalorder %s20, %s23
    %p32 = scmp.eq.s32.totalorder %s15, 1
    %p33 = por %p31, %p32
    %p34 = scmp.ne.s32.totalorder %s23, %s24
    %p35 = scmp.eq.s32.totalorder %s15, 0
    %p36 = por %p34, %p35
    %p37 = scmp.ne.s32.totalorder %s23, %s24
    %p38 = scmp.eq.s32.totalorder %s16, 1
    %p39 = por %p37, %p38
    %p41 = scmp.ne.s32.totalorder %s24, %s40
    %p42 = scmp.eq.s32.totalorder %s16, 0
    %p43 = por %p41, %p42
    %s44 = ssub.s32 %s10, %s17
    %p45 = scmp.eq.s32.totalorder %s44, 0
    %s47 = sadd.s32 %s46, 1
    %s48 = scalar_select %p45, %s46, %s47
    %p51 = pneg %p45
    %p52 = scmp.eq.s32.totalorder %s10, 1
    %p53 = por %p51, %p52
    %p54 = scmp.ne.s32.totalorder %s46, %s49
    %p55 = scmp.eq.s32.totalorder %s10, 0
    %p56 = por %p54, %p55
    %p57 = scmp.ne.s32.totalorder %s46, %s49
    %p58 = scmp.eq.s32.totalorder %s15, 1
    %p59 = por %p57, %p58
    %p60 = scmp.ne.s32.totalorder %s49, %s50
    %p61 = scmp.eq.s32.totalorder %s15, 0
    %p62 = por %p60, %p61
    %p63 = scmp.ne.s32.totalorder %s49, %s50
    %p64 = scmp.eq.s32.totalorder %s16, 1
    %p65 = por %p63, %p64
    %p67 = scmp.ne.s32.totalorder %s50, %s66
    %p68 = scmp.eq.s32.totalorder %s16, 0
    %p69 = por %p67, %p68
    %s71 = sadd.s32 %s70, 1
    %p74 = scmp.eq.s32.totalorder %s10, 1
    %p75 = scmp.ne.s32.totalorder %s70, %s72
    %p76 = scmp.eq.s32.totalorder %s10, 0
    %p77 = por %p75, %p76
    %p78 = scmp.ne.s32.totalorder %s70, %s72
    %p79 = scmp.eq.s32.totalorder %s15, 1
    %p80 = por %p78, %p79
    %p81 = scmp.ne.s32.totalorder %s72, %s73
    %p82 = scmp.eq.s32.totalorder %s15, 0
    %p83 = por %p81, %p82
    %p84 = scmp.ne.s32.totalorder %s72, %s73
    %p85 = scmp.eq.s32.totalorder %s16, 1
    %p86 = por %p84, %p85
    %p88 = scmp.ne.s32.totalorder %s73, %s87
    %p89 = scmp.eq.s32.totalorder %s16, 0
    %p90 = por %p88, %p89
    %s92 = sadd.s32 %s91, 1
    %p95 = scmp.eq.s32.totalorder %s10, 1
    %p96 = scmp.ne.s32.totalorder %s91, %s93
    %p97 = scmp.eq.s32.totalorder %s10, 0
    %p98 = por %p96, %p97
    %p99 = scmp.ne.s32.totalorder %s91, %s93
    %p100 = scmp.eq.s32.totalorder %s15, 1
    %p101 = por %p99, %p100
    %p102 = scmp.ne.s32.totalorder %s93, %s94
    %p103 = scmp.eq.s32.totalorder %s15, 0
    %p104 = por %p102, %p103
    %p105 = scmp.ne.s32.totalorder %s93, %s94
    %p106 = scmp.eq.s32.totalorder %s16, 1
    %p107 = por %p105, %p106
    %p109 = scmp.ne.s32.totalorder %s94, %s108
    %p110 = scmp.eq.s32.totalorder %s16, 0
    %p111 = por %p109, %p110
    %s112 = ssub.s32 %s10, %s17
    %p113 = scmp.eq.s32.totalorder %s112, 0
    %s115 = sadd.s32 %s114, 1
    %s116 = scalar_select %p113, %s114, %s115
    %p119 = pneg %p113
    %p120 = scmp.eq.s32.totalorder %s10, 1
    %p121 = por %p119, %p120
    %p122 = scmp.ne.s32.totalorder %s114, %s117
    %p123 = scmp.eq.s32.totalorder %s10, 0
    %p124 = por %p122, %p123
    %p125 = scmp.ne.s32.totalorder %s114, %s117
    %p126 = scmp.eq.s32.totalorder %s15, 1
    %p127 = por %p125, %p126
    %p128 = scmp.ne.s32.totalorder %s117, %s118
    %p129 = scmp.eq.s32.totalorder %s15, 0
    %p130 = por %p128, %p129
    %p131 = scmp.ne.s32.totalorder %s117, %s118
    %p132 = scmp.eq.s32.totalorder %s16, 1
    %p133 = por %p131, %p132
    %p135 = scmp.ne.s32.totalorder %s118, %s134
    %p136 = scmp.eq.s32.totalorder %s16, 0
    %p137 = por %p135, %p136
    %p138 = scmp.le.s32.totalorder 1, %s10
    %p139 = scmp.lt.s32.totalorder %s10, 3
    %p140 = pnand %p138, %p139
    %p141 = pneg %p140
    // Predicated region
    $region9: #{cmt_forward.1} parent=5 // pred_check
      _
    $region10: #{cmt_forward.1} parent=5 // pred_check_branch
      %143 = sbr.rel (%p140) target = $region12
    $region11: #{cmt_forward.1} parent=5 // pred_region
      %s144 = ssub.s32 %s10, 1
      // Predicated region
      $region13: #{cmt_forward.1} parent=11 // pred_check
        %p145 = pneg %p83
      $region14: #{cmt_forward.1} parent=11 // pred_check_branch
        %147 = sbr.rel (%p145) target = $region16
      $region15: #{cmt_forward.1} parent=11 // pred_region
        _
      $region16: #{cmt_forward.1} parent=11 // pred_fallthru
        _
      // Predicated region
      $region17: #{cmt_forward.1} parent=11 // pred_check
        %p148 = pneg %p104
      $region18: #{cmt_forward.1} parent=11 // pred_check_branch
        %150 = sbr.rel (%p148) target = $region20
      $region19: #{cmt_forward.1} parent=11 // pred_region
        _
      $region20: #{cmt_forward.1} parent=11 // pred_fallthru
        _
    $region12: #{cmt_forward.1} parent=5 // pred_fallthru
      _
    %p151 = scmp.lt.s32.totalorder %s10, 2
    // Predicated region
    $region21: #{cmt_forward.1} parent=5 // pred_check
      %p152 = pneg %p151
    $region22: #{cmt_forward.1} parent=5 // pred_check_branch
      %154 = sbr.rel (%p152) target = $region24
    $region23: #{cmt_forward.1} parent=5 // pred_region
      // Predicated region
      $region25: #{cmt_forward.1} parent=23 // pred_check
        %p155 = pneg %p30
      $region26: #{cmt_forward.1} parent=23 // pred_check_branch
        %157 = sbr.rel (%p155) target = $region28
      $region27: #{cmt_forward.1} parent=23 // pred_region
        %p158 = scmp.lt.s32.totalorder %s10, 1
        %s159 = scalar_select %p158, %s10, 1
        %s160 = smul.addr %s159, 8
        %s161 = smul.addr %s160, 8
        %s162 = scalar_lea.vmem %s0, %s161
      $region28: #{cmt_forward.1} parent=23 // pred_fallthru
        _
      // Predicated region
      $region29: #{cmt_forward.1} parent=23 // pred_check
        %p163 = pneg %p56
      $region30: #{cmt_forward.1} parent=23 // pred_check_branch
        %165 = sbr.rel (%p163) target = $region32
      $region31: #{cmt_forward.1} parent=23 // pred_region
        %p166 = scmp.lt.s32.totalorder %s10, 1
        %s167 = scalar_select %p166, %s10, 1
        %s168 = smul.addr %s167, 8
        %s169 = smul.addr %s168, 8
        %s170 = scalar_lea.vmem %s1, %s169
      $region32: #{cmt_forward.1} parent=23 // pred_fallthru
        _
    $region24: #{cmt_forward.1} parent=5 // pred_fallthru
      _
    %p171 = scmp.le.s32.totalorder 1, %s10
    %p172 = scmp.lt.s32.totalorder %s10, 3
    %p173 = pnand %p171, %p172
    %p174 = pneg %p173
    // Predicated region
    $region33: #{cmt_forward.1} parent=5 // pred_check
      _
    $region34: #{cmt_forward.1} parent=5 // pred_check_branch
      %176 = sbr.rel (%p173) target = $region36
    $region35: #{cmt_forward.1} parent=5 // pred_region
      %s177 = ssub.s32 %s10, 1
      %p178 = scmp.lt.s32.totalorder %s15, 1
      %s179 = scalar_select %p178, %s15, 1
      %s180 = smul.addr %s179, 8
      %s181 = smul.addr %s180, 8
      %s182 = scalar_lea.vmem %s0, %s181
      %p183 = pneg %p36
      %p184 = pneg %p33
      %p185 = scmp.lt.s32.totalorder %s15, 1
      %s186 = scalar_select %p185, %s15, 1
      %s187 = smul.addr %s186, 8
      %s188 = smul.addr %s187, 8
      %s189 = scalar_lea.vmem %s1, %s188
      %p190 = pneg %p62
      %p191 = pneg %p59
      %p192 = pneg %p83
      %p193 = pneg %p80
      %p194 = pneg %p104
      %p195 = pneg %p101
      %p196 = pneg %p130
      %p197 = pneg %p127
      %p198 = scmp.lt.s32.totalorder %s15, 1
      %s199 = scalar_select %p198, %s15, 1
      %s200 = smul.addr %s199, 8
      %s201 = smul.addr %s200, 8
      %s202 = scalar_lea.vmem %s4, %s201
      %p203 = scmp.lt.s32.totalorder %s15, 1
      %s204 = scalar_select %p203, %s15, 1
      %s205 = smul.addr %s204, 8
      %s206 = smul.addr %s205, 8
      %s207 = scalar_lea.vmem %s0, %s206
      %p208 = scmp.lt.s32.totalorder %s15, 1
      %s209 = scalar_select %p208, %s15, 1
      %s210 = smul.addr %s209, 8
      %s211 = smul.addr %s210, 8
      %s212 = scalar_lea.vmem %s1, %s211
      %p213 = scmp.lt.s32.totalorder %s15, 1
      %s214 = scalar_select %p213, %s15, 1
      %s215 = smul.addr %s214, 8
      %s216 = smul.addr %s215, 8
      %s217 = scalar_lea.vmem %s4, %s216
      %v218 = vld [vmem:[%s2] sm:$0xff]
      %v219 = vld [vmem:[%s3] sm:$0xff]
      %v220 = vld [vmem:[%s3 + $0x8] sm:$0xff]
      %v221 = vld [vmem:[%s3 + $0x10] sm:$0xff]
      %v222 = vld [vmem:[%s3 + $0x18] sm:$0xff]
      %v223 = vld [vmem:[%s3 + $0x20] sm:$0x1]
      %v224 = vld [vmem:[%s207] sm:$0xff]
      %v225 = vld [vmem:[%s207 + $0x8] sm:$0xff]
      %v226 = vld [vmem:[%s207 + $0x10] sm:$0xff]
      %v227 = vld [vmem:[%s207 + $0x18] sm:$0xff]
      %v228 = vld [vmem:[%s207 + $0x20] sm:$0xff]
      %v229 = vld [vmem:[%s207 + $0x28] sm:$0xff]
      %v230 = vld [vmem:[%s207 + $0x30] sm:$0xff]
      %v231 = vld [vmem:[%s207 + $0x38] sm:$0xff]
      %v232 = vld [vmem:[%s212] sm:$0xff]
      %v233 = vld [vmem:[%s212 + $0x8] sm:$0xff]
      %v234 = vld [vmem:[%s212 + $0x10] sm:$0xff]
      %v235 = vld [vmem:[%s212 + $0x18] sm:$0xff]
      %v236 = vld [vmem:[%s212 + $0x20] sm:$0xff]
      %v237 = vld [vmem:[%s212 + $0x28] sm:$0xff]
      %v238 = vld [vmem:[%s212 + $0x30] sm:$0xff]
      %v239 = vld [vmem:[%s212 + $0x38] sm:$0xff]
      %v241 = vcombine.high %v218, %v218
      %v243 = vand.u32 %v233, 4294901760
      %244 = vmatprep.subr.mxu0 %v243
      %v245 = vand.u32 %v232, 4294901760
      %246 = vmatpush1.xpose.msra.mxu0 %v245
      %v247 = vand.u32 %v235, 4294901760
      %248 = vmatprep.subr.mxu0 %v247
      %v249 = vand.u32 %v234, 4294901760
      %250 = vmatpush1.xpose.msra.mxu0 %v249
      %v251 = vand.u32 %v237, 4294901760
      %252 = vmatprep.subr.mxu0 %v251
      %v253 = vand.u32 %v236, 4294901760
      %254 = vmatpush1.xpose.msra.mxu0 %v253
      %v255 = vand.u32 %v239, 4294901760
      %256 = vmatprep.subr.mxu0 %v255
      %v257 = vand.u32 %v238, 4294901760
      %258 = vmatpush1.xpose.msra.mxu0 %v257
      %259 = vmatprep.subr.mxu0 0.0
      %260 = vmatpush1.xpose.msra.mxu0 0.0
      %261 = vmatprep.subr.mxu0 0.0
      %262 = vmatpush1.xpose.msra.mxu0 0.0
      %263 = vmatprep.subr.mxu0 0.0
      %264 = vmatpush1.xpose.msra.mxu0 0.0
      %265 = vmatprep.subr.mxu0 0.0
      %266 = vmatpush1.xpose.msra.mxu0 0.0
      %267 = vmatprep.subr.mxu0 0.0
      %268 = vmatpush1.xpose.msra.mxu0 0.0
      %269 = vmatprep.subr.mxu0 0.0
      %270 = vmatpush1.xpose.msra.mxu0 0.0
      %271 = vmatprep.subr.mxu0 0.0
      %272 = vmatpush1.xpose.msra.mxu0 0.0
      %273 = vmatprep.subr.mxu0 0.0
      %274 = vmatpush1.xpose.msra.mxu0 0.0
      %275 = vmatprep.subr.mxu0 0.0
      %276 = vmatpush1.xpose.msra.mxu0 0.0
      %277 = vmatprep.subr.mxu0 0.0
      %278 = vmatpush1.xpose.msra.mxu0 0.0
      %279 = vmatprep.subr.mxu0 0.0
      %280 = vmatpush1.xpose.msra.mxu0 0.0
      %281 = vmatprep.subr.mxu0 0.0
      %282 = vmatpush1.xpose.msra.mxu0 0.0
      %283 = vmatprep.subr.mxu0 0.0
      %284 = vmatpush1.xpose.msra.mxu0 0.0
      %285 = vmatprep.subr.mxu0 0.0
      %286 = vmatpush1.xpose.msra.mxu0 0.0
      %287 = vmatprep.subr.mxu0 0.0
      %288 = vmatpush1.xpose.msra.mxu0 0.0
      %289 = vmatprep.subr.mxu0 0.0
      %290 = vmatpush1.xpose.msra.mxu0 0.0
      %291 = vmatprep.subr.mxu0 0.0
      %292 = vmatpush1.xpose.msra.mxu0 0.0
      %293 = vmatprep.subr.mxu0 0.0
      %294 = vmatpush1.xpose.msra.mxu0 0.0
      %295 = vmatprep.subr.mxu0 0.0
      %296 = vmatpush1.xpose.msra.mxu0 0.0
      %297 = vmatprep.subr.mxu0 0.0
      %298 = vmatpush1.xpose.msra.mxu0 0.0
      %299 = vmatprep.subr.mxu0 0.0
      %300 = vmatpush1.xpose.msra.mxu0 0.0
      %301 = vmatprep.subr.mxu0 0.0
      %302 = vmatpush1.xpose.msra.mxu0 0.0
      %303 = vmatprep.subr.mxu0 0.0
      %304 = vmatpush1.xpose.msra.mxu0 0.0
      %305 = vmatprep.subr.mxu0 0.0
      %306 = vmatpush1.xpose.msra.mxu0 0.0
      %307 = vmatprep.subr.mxu0 0.0
      %308 = vmatpush1.xpose.msra.mxu0 0.0
      %309 = vmatprep.subr.mxu0 0.0
      %310 = vmatpush1.xpose.msra.mxu0 0.0
      %311 = vmatprep.subr.mxu0 0.0
      %312 = vmatpush1.xpose.msra.mxu0 0.0
      %313 = vmatprep.subr.mxu0 0.0
      %314 = vmatpush1.xpose.msra.mxu0 0.0
      %v315 = vand.u32 %v241, 4294901760
      %v316 = vsub.f32 %v241, %v315
      %v317 = vand.u32 %v316, 4294901760
      %v318 = vsub.f32 %v316, %v317
      %v319 = vand.u32 %v318, 4294901760
      %320 = vmatprep.mubr.f32.mxu0 %v319
      %v321 = vand.u32 %v218, 4294901760
      %v322 = vsub.f32 %v218, %v321
      %v323 = vand.u32 %v322, 4294901760
      %v324 = vsub.f32 %v322, %v323
      %v325 = vand.u32 %v324, 4294901760
      %326 = vmatmul.mubr.f32.gmra.mrb[0].mxu0 %v325
      %v327 = vpop.f32.mrb[0].mxu0
      %v328 = vadd.f32 0.0, %v327
      %v329 = vpop.f32.mrb[0].mxu0
      %330 = vdwg.mxu0
      %v331 = vand.u32 %v233, 4294901760
      %v332 = vsub.f32 %v233, %v331
      %v333 = vand.u32 %v332, 4294901760
      %v334 = vsub.f32 %v332, %v333
      %v335 = vand.u32 %v334, 4294901760
      %336 = vmatprep.subr.mxu0 %v335
      %v337 = vand.u32 %v232, 4294901760
      %v338 = vsub.f32 %v232, %v337
      %v339 = vand.u32 %v338, 4294901760
      %v340 = vsub.f32 %v338, %v339
      %v341 = vand.u32 %v340, 4294901760
      %342 = vmatpush1.xpose.msra.mxu0 %v341
      %v343 = vand.u32 %v235, 4294901760
      %v344 = vsub.f32 %v235, %v343
      %v345 = vand.u32 %v344, 4294901760
      %v346 = vsub.f32 %v344, %v345
      %v347 = vand.u32 %v346, 4294901760
      %348 = vmatprep.subr.mxu0 %v347
      %v349 = vand.u32 %v234, 4294901760
      %v350 = vsub.f32 %v234, %v349
      %v351 = vand.u32 %v350, 4294901760
      %v352 = vsub.f32 %v350, %v351
      %v353 = vand.u32 %v352, 4294901760
      %354 = vmatpush1.xpose.msra.mxu0 %v353
      %v355 = vand.u32 %v237, 4294901760
      %v356 = vsub.f32 %v237, %v355
      %v357 = vand.u32 %v356, 4294901760
      %v358 = vsub.f32 %v356, %v357
      %v359 = vand.u32 %v358, 4294901760
      %360 = vmatprep.subr.mxu0 %v359
      %v361 = vand.u32 %v236, 4294901760
      %v362 = vsub.f32 %v236, %v361
      %v363 = vand.u32 %v362, 4294901760
      %v364 = vsub.f32 %v362, %v363
      %v365 = vand.u32 %v364, 4294901760
      %366 = vmatpush1.xpose.msra.mxu0 %v365
      %v367 = vand.u32 %v239, 4294901760
      %v368 = vsub.f32 %v239, %v367
      %v369 = vand.u32 %v368, 4294901760
      %v370 = vsub.f32 %v368, %v369
      %v371 = vand.u32 %v370, 4294901760
      %372 = vmatprep.subr.mxu0 %v371
      %v373 = vand.u32 %v238, 4294901760
      %v374 = vsub.f32 %v238, %v373
      %v375 = vand.u32 %v374, 4294901760
      %v376 = vsub.f32 %v374, %v375
      %v377 = vand.u32 %v376, 4294901760
      %378 = vmatpush1.xpose.msra.mxu0 %v377
      %379 = vmatprep.subr.mxu0 0.0
      %380 = vmatpush1.xpose.msra.mxu0 0.0
      %381 = vmatprep.subr.mxu0 0.0
      %382 = vmatpush1.xpose.msra.mxu0 0.0
      %383 = vmatprep.subr.mxu0 0.0
      %384 = vmatpush1.xpose.msra.mxu0 0.0
      %385 = vmatprep.subr.mxu0 0.0
      %386 = vmatpush1.xpose.msra.mxu0 0.0
      %387 = vmatprep.subr.mxu0 0.0
      %388 = vmatpush1.xpose.msra.mxu0 0.0
      %389 = vmatprep.subr.mxu0 0.0
      %390 = vmatpush1.xpose.msra.mxu0 0.0
      %391 = vmatprep.subr.mxu0 0.0
      %392 = vmatpush1.xpose.msra.mxu0 0.0
      %393 = vmatprep.subr.mxu0 0.0
      %394 = vmatpush1.xpose.msra.mxu0 0.0
      %395 = vmatprep.subr.mxu0 0.0
      %396 = vmatpush1.xpose.msra.mxu0 0.0
      %397 = vmatprep.subr.mxu0 0.0
      %398 = vmatpush1.xpose.msra.mxu0 0.0
      %399 = vmatprep.subr.mxu0 0.0
      %400 = vmatpush1.xpose.msra.mxu0 0.0
      %401 = vmatprep.subr.mxu0 0.0
      %402 = vmatpush1.xpose.msra.mxu0 0.0
      %403 = vmatprep.subr.mxu0 0.0
      %404 = vmatpush1.xpose.msra.mxu0 0.0
      %405 = vmatprep.subr.mxu0 0.0
      %406 = vmatpush1.xpose.msra.mxu0 0.0
      %407 = vmatprep.subr.mxu0 0.0
      %408 = vmatpush1.xpose.msra.mxu0 0.0
      %409 = vmatprep.subr.mxu0 0.0
      %410 = vmatpush1.xpose.msra.mxu0 0.0
      %411 = vmatprep.subr.mxu0 0.0
      %412 = vmatpush1.xpose.msra.mxu0 0.0
      %413 = vmatprep.subr.mxu0 0.0
      %414 = vmatpush1.xpose.msra.mxu0 0.0
      %415 = vmatprep.subr.mxu0 0.0
      %416 = vmatpush1.xpose.msra.mxu0 0.0
      %417 = vmatprep.subr.mxu0 0.0
      %418 = vmatpush1.xpose.msra.mxu0 0.0
      %419 = vmatprep.subr.mxu0 0.0
      %420 = vmatpush1.xpose.msra.mxu0 0.0
      %421 = vmatprep.subr.mxu0 0.0
      %422 = vmatpush1.xpose.msra.mxu0 0.0
      %423 = vmatprep.subr.mxu0 0.0
      %424 = vmatpush1.xpose.msra.mxu0 0.0
      %425 = vmatprep.subr.mxu0 0.0
      %426 = vmatpush1.xpose.msra.mxu0 0.0
      %427 = vmatprep.subr.mxu0 0.0
      %428 = vmatpush1.xpose.msra.mxu0 0.0
      %429 = vmatprep.subr.mxu0 0.0
      %430 = vmatpush1.xpose.msra.mxu0 0.0
      %431 = vmatprep.subr.mxu0 0.0
      %432 = vmatpush1.xpose.msra.mxu0 0.0
      %433 = vmatprep.subr.mxu0 0.0
      %434 = vmatpush1.xpose.msra.mxu0 0.0
      %v435 = vand.u32 %v241, 4294901760
      %436 = vmatprep.mubr.f32.mxu0 %v435
      %v437 = vand.u32 %v218, 4294901760
      %438 = vmatmul.mubr.f32.gmra.mrb[0].mxu0 %v437
      %v439 = vpop.f32.mrb[0].mxu0
      %v440 = vadd.f32 %v328, %v439
      %v441 = vpop.f32.mrb[0].mxu0
      %442 = vdwg.mxu0
      %v443 = vand.u32 %v233, 4294901760
      %v444 = vsub.f32 %v233, %v443
      %445 = vmatprep.subr.mxu0 %v444
      %v446 = vand.u32 %v232, 4294901760
      %v447 = vsub.f32 %v232, %v446
      %448 = vmatpush1.xpose.msra.mxu0 %v447
      %v449 = vand.u32 %v235, 4294901760
      %v450 = vsub.f32 %v235, %v449
      %451 = vmatprep.subr.mxu0 %v450
      %v452 = vand.u32 %v234, 4294901760
      %v453 = vsub.f32 %v234, %v452
      %454 = vmatpush1.xpose.msra.mxu0 %v453
      %v455 = vand.u32 %v237, 4294901760
      %v456 = vsub.f32 %v237, %v455
      %457 = vmatprep.subr.mxu0 %v456
      %v458 = vand.u32 %v236, 4294901760
      %v459 = vsub.f32 %v236, %v458
      %460 = vmatpush1.xpose.msra.mxu0 %v459
      %v461 = vand.u32 %v239, 4294901760
      %v462 = vsub.f32 %v239, %v461
      %463 = vmatprep.subr.mxu0 %v462
      %v464 = vand.u32 %v238, 4294901760
      %v465 = vsub.f32 %v238, %v464
      %466 = vmatpush1.xpose.msra.mxu0 %v465
      %467 = vmatprep.subr.mxu0 0.0
      %468 = vmatpush1.xpose.msra.mxu0 0.0
      %469 = vmatprep.subr.mxu0 0.0
      %470 = vmatpush1.xpose.msra.mxu0 0.0
      %471 = vmatprep.subr.mxu0 0.0
      %472 = vmatpush1.xpose.msra.mxu0 0.0
      %473 = vmatprep.subr.mxu0 0.0
      %474 = vmatpush1.xpose.msra.mxu0 0.0
      %475 = vmatprep.subr.mxu0 0.0
      %476 = vmatpush1.xpose.msra.mxu0 0.0
      %477 = vmatprep.subr.mxu0 0.0
      %478 = vmatpush1.xpose.msra.mxu0 0.0
      %479 = vmatprep.subr.mxu0 0.0
      %480 = vmatpush1.xpose.msra.mxu0 0.0
      %481 = vmatprep.subr.mxu0 0.0
      %482 = vmatpush1.xpose.msra.mxu0 0.0
      %483 = vmatprep.subr.mxu0 0.0
      %484 = vmatpush1.xpose.msra.mxu0 0.0
      %485 = vmatprep.subr.mxu0 0.0
      %486 = vmatpush1.xpose.msra.mxu0 0.0
      %487 = vmatprep.subr.mxu0 0.0
      %488 = vmatpush1.xpose.msra.mxu0 0.0
      %489 = vmatprep.subr.mxu0 0.0
      %490 = vmatpush1.xpose.msra.mxu0 0.0
      %491 = vmatprep.subr.mxu0 0.0
      %492 = vmatpush1.xpose.msra.mxu0 0.0
      %493 = vmatprep.subr.mxu0 0.0
      %494 = vmatpush1.xpose.msra.mxu0 0.0
      %495 = vmatprep.subr.mxu0 0.0
      %496 = vmatpush1.xpose.msra.mxu0 0.0
      %497 = vmatprep.subr.mxu0 0.0
      %498 = vmatpush1.xpose.msra.mxu0 0.0
      %499 = vmatprep.subr.mxu0 0.0
      %500 = vmatpush1.xpose.msra.mxu0 0.0
      %501 = vmatprep.subr.mxu0 0.0
      %502 = vmatpush1.xpose.msra.mxu0 0.0
      %503 = vmatprep.subr.mxu0 0.0
      %504 = vmatpush1.xpose.msra.mxu0 0.0
      %505 = vmatprep.subr.mxu0 0.0
      %506 = vmatpush1.xpose.msra.mxu0 0.0
      %507 = vmatprep.subr.mxu0 0.0
      %508 = vmatpush1.xpose.msra.mxu0 0.0
      %509 = vmatprep.subr.mxu0 0.0
      %510 = vmatpush1.xpose.msra.mxu0 0.0
      %511 = vmatprep.subr.mxu0 0.0
      %512 = vmatpush1.xpose.msra.mxu0 0.0
      %513 = vmatprep.subr.mxu0 0.0
      %514 = vmatpush1.xpose.msra.mxu0 0.0
      %515 = vmatprep.subr.mxu0 0.0
      %516 = vmatpush1.xpose.msra.mxu0 0.0
      %517 = vmatprep.subr.mxu0 0.0
      %518 = vmatpush1.xpose.msra.mxu0 0.0
      %519 = vmatprep.subr.mxu0 0.0
      %520 = vmatpush1.xpose.msra.mxu0 0.0
      %521 = vmatprep.subr.mxu0 0.0
      %522 = vmatpush1.xpose.msra.mxu0 0.0
      %v523 = vand.u32 %v241, 4294901760
      %v524 = vsub.f32 %v241, %v523
      %525 = vmatprep.mubr.f32.mxu0 %v524
      %v526 = vand.u32 %v218, 4294901760
      %v527 = vsub.f32 %v218, %v526
      %528 = vmatmul.mubr.f32.gmra.mrb[0].mxu0 %v527
      %v529 = vpop.f32.mrb[0].mxu0
      %v530 = vadd.f32 %v440, %v529
      %v531 = vpop.f32.mrb[0].mxu0
      %532 = vdwg.mxu0
      %v533 = vand.u32 %v233, 4294901760
      %534 = vmatprep.subr.mxu0 %v533
      %v535 = vand.u32 %v232, 4294901760
      %536 = vmatpush1.xpose.msra.mxu0 %v535
      %v537 = vand.u32 %v235, 4294901760
      %538 = vmatprep.subr.mxu0 %v537
      %v539 = vand.u32 %v234, 4294901760
      %540 = vmatpush1.xpose.msra.mxu0 %v539
      %v541 = vand.u32 %v237, 4294901760
      %542 = vmatprep.subr.mxu0 %v541
      %v543 = vand.u32 %v236, 4294901760
      %544 = vmatpush1.xpose.msra.mxu0 %v543
      %v545 = vand.u32 %v239, 4294901760
      %546 = vmatprep.subr.mxu0 %v545
      %v547 = vand.u32 %v238, 4294901760
      %548 = vmatpush1.xpose.msra.mxu0 %v547
      %549 = vmatprep.subr.mxu0 0.0
      %550 = vmatpush1.xpose.msra.mxu0 0.0
      %551 = vmatprep.subr.mxu0 0.0
      %552 = vmatpush1.xpose.msra.mxu0 0.0
      %553 = vmatprep.subr.mxu0 0.0
      %554 = vmatpush1.xpose.msra.mxu0 0.0
      %555 = vmatprep.subr.mxu0 0.0
      %556 = vmatpush1.xpose.msra.mxu0 0.0
      %557 = vmatprep.subr.mxu0 0.0
      %558 = vmatpush1.xpose.msra.mxu0 0.0
      %559 = vmatprep.subr.mxu0 0.0
      %560 = vmatpush1.xpose.msra.mxu0 0.0
      %561 = vmatprep.subr.mxu0 0.0
      %562 = vmatpush1.xpose.msra.mxu0 0.0
      %563 = vmatprep.subr.mxu0 0.0
      %564 = vmatpush1.xpose.msra.mxu0 0.0
      %565 = vmatprep.subr.mxu0 0.0
      %566 = vmatpush1.xpose.msra.mxu0 0.0
      %567 = vmatprep.subr.mxu0 0.0
      %568 = vmatpush1.xpose.msra.mxu0 0.0
      %569 = vmatprep.subr.mxu0 0.0
      %570 = vmatpush1.xpose.msra.mxu0 0.0
      %571 = vmatprep.subr.mxu0 0.0
      %572 = vmatpush1.xpose.msra.mxu0 0.0
      %573 = vmatprep.subr.mxu0 0.0
      %574 = vmatpush1.xpose.msra.mxu0 0.0
      %575 = vmatprep.subr.mxu0 0.0
      %576 = vmatpush1.xpose.msra.mxu0 0.0
      %577 = vmatprep.subr.mxu0 0.0
      %578 = vmatpush1.xpose.msra.mxu0 0.0
      %579 = vmatprep.subr.mxu0 0.0
      %580 = vmatpush1.xpose.msra.mxu0 0.0
      %581 = vmatprep.subr.mxu0 0.0
      %582 = vmatpush1.xpose.msra.mxu0 0.0
      %583 = vmatprep.subr.mxu0 0.0
      %584 = vmatpush1.xpose.msra.mxu0 0.0
      %585 = vmatprep.subr.mxu0 0.0
      %586 = vmatpush1.xpose.msra.mxu0 0.0
      %587 = vmatprep.subr.mxu0 0.0
      %588 = vmatpush1.xpose.msra.mxu0 0.0
      %589 = vmatprep.subr.mxu0 0.0
      %590 = vmatpush1.xpose.msra.mxu0 0.0
      %591 = vmatprep.subr.mxu0 0.0
      %592 = vmatpush1.xpose.msra.mxu0 0.0
      %593 = vmatprep.subr.mxu0 0.0
      %594 = vmatpush1.xpose.msra.mxu0 0.0
      %595 = vmatprep.subr.mxu0 0.0
      %596 = vmatpush1.xpose.msra.mxu0 0.0
      %597 = vmatprep.subr.mxu0 0.0
      %598 = vmatpush1.xpose.msra.mxu0 0.0
      %599 = vmatprep.subr.mxu0 0.0
      %600 = vmatpush1.xpose.msra.mxu0 0.0
      %601 = vmatprep.subr.mxu0 0.0
      %602 = vmatpush1.xpose.msra.mxu0 0.0
      %603 = vmatprep.subr.mxu0 0.0
      %604 = vmatpush1.xpose.msra.mxu0 0.0
      %v605 = vand.u32 %v241, 4294901760
      %v606 = vsub.f32 %v241, %v605
      %v607 = vand.u32 %v606, 4294901760
      %608 = vmatprep.mubr.f32.mxu0 %v607
      %v609 = vand.u32 %v218, 4294901760
      %v610 = vsub.f32 %v218, %v609
      %v611 = vand.u32 %v610, 4294901760
      %612 = vmatmul.mubr.f32.gmra.mrb[0].mxu0 %v611
      %v613 = vpop.f32.mrb[0].mxu0
      %v614 = vadd.f32 %v530, %v613
      %v615 = vpop.f32.mrb[0].mxu0
      %616 = vdwg.mxu0
      %v617 = vand.u32 %v233, 4294901760
      %v618 = vsub.f32 %v233, %v617
      %v619 = vand.u32 %v618, 4294901760
      %620 = vmatprep.subr.mxu0 %v619
      %v621 = vand.u32 %v232, 4294901760
      %v622 = vsub.f32 %v232, %v621
      %v623 = vand.u32 %v622, 4294901760
      %624 = vmatpush1.xpose.msra.mxu0 %v623
      %v625 = vand.u32 %v235, 4294901760
      %v626 = vsub.f32 %v235, %v625
      %v627 = vand.u32 %v626, 4294901760
      %628 = vmatprep.subr.mxu0 %v627
      %v629 = vand.u32 %v234, 4294901760
      %v630 = vsub.f32 %v234, %v629
      %v631 = vand.u32 %v630, 4294901760
      %632 = vmatpush1.xpose.msra.mxu0 %v631
      %v633 = vand.u32 %v237, 4294901760
      %v634 = vsub.f32 %v237, %v633
      %v635 = vand.u32 %v634, 4294901760
      %636 = vmatprep.subr.mxu0 %v635
      %v637 = vand.u32 %v236, 4294901760
      %v638 = vsub.f32 %v236, %v637
      %v639 = vand.u32 %v638, 4294901760
      %640 = vmatpush1.xpose.msra.mxu0 %v639
      %v641 = vand.u32 %v239, 4294901760
      %v642 = vsub.f32 %v239, %v641
      %v643 = vand.u32 %v642, 4294901760
      %644 = vmatprep.subr.mxu0 %v643
      %v645 = vand.u32 %v238, 4294901760
      %v646 = vsub.f32 %v238, %v645
      %v647 = vand.u32 %v646, 4294901760
      %648 = vmatpush1.xpose.msra.mxu0 %v647
      %649 = vmatprep.subr.mxu0 0.0
      %650 = vmatpush1.xpose.msra.mxu0 0.0
      %651 = vmatprep.subr.mxu0 0.0
      %652 = vmatpush1.xpose.msra.mxu0 0.0
      %653 = vmatprep.subr.mxu0 0.0
      %654 = vmatpush1.xpose.msra.mxu0 0.0
      %655 = vmatprep.subr.mxu0 0.0
      %656 = vmatpush1.xpose.msra.mxu0 0.0
      %657 = vmatprep.subr.mxu0 0.0
      %658 = vmatpush1.xpose.msra.mxu0 0.0
      %659 = vmatprep.subr.mxu0 0.0
      %660 = vmatpush1.xpose.msra.mxu0 0.0
      %661 = vmatprep.subr.mxu0 0.0
      %662 = vmatpush1.xpose.msra.mxu0 0.0
      %663 = vmatprep.subr.mxu0 0.0
      %664 = vmatpush1.xpose.msra.mxu0 0.0
      %665 = vmatprep.subr.mxu0 0.0
      %666 = vmatpush1.xpose.msra.mxu0 0.0
      %667 = vmatprep.subr.mxu0 0.0
      %668 = vmatpush1.xpose.msra.mxu0 0.0
      %669 = vmatprep.subr.mxu0 0.0
      %670 = vmatpush1.xpose.msra.mxu0 0.0
      %671 = vmatprep.subr.mxu0 0.0
      %672 = vmatpush1.xpose.msra.mxu0 0.0
      %673 = vmatprep.subr.mxu0 0.0
      %674 = vmatpush1.xpose.msra.mxu0 0.0
      %675 = vmatprep.subr.mxu0 0.0
      %676 = vmatpush1.xpose.msra.mxu0 0.0
      %677 = vmatprep.subr.mxu0 0.0
      %678 = vmatpush1.xpose.msra.mxu0 0.0
      %679 = vmatprep.subr.mxu0 0.0
      %680 = vmatpush1.xpose.msra.mxu0 0.0
      %681 = vmatprep.subr.mxu0 0.0
      %682 = vmatpush1.xpose.msra.mxu0 0.0
      %683 = vmatprep.subr.mxu0 0.0
      %684 = vmatpush1.xpose.msra.mxu0 0.0
      %685 = vmatprep.subr.mxu0 0.0
      %686 = vmatpush1.xpose.msra.mxu0 0.0
      %687 = vmatprep.subr.mxu0 0.0
      %688 = vmatpush1.xpose.msra.mxu0 0.0
      %689 = vmatprep.subr.mxu0 0.0
      %690 = vmatpush1.xpose.msra.mxu0 0.0
      %691 = vmatprep.subr.mxu0 0.0
      %692 = vmatpush1.xpose.msra.mxu0 0.0
      %693 = vmatprep.subr.mxu0 0.0
      %694 = vmatpush1.xpose.msra.mxu0 0.0
      %695 = vmatprep.subr.mxu0 0.0
      %696 = vmatpush1.xpose.msra.mxu0 0.0
      %697 = vmatprep.subr.mxu0 0.0
      %698 = vmatpush1.xpose.msra.mxu0 0.0
      %699 = vmatprep.subr.mxu0 0.0
      %700 = vmatpush1.xpose.msra.mxu0 0.0
      %701 = vmatprep.subr.mxu0 0.0
      %702 = vmatpush1.xpose.msra.mxu0 0.0
      %703 = vmatprep.subr.mxu0 0.0
      %704 = vmatpush1.xpose.msra.mxu0 0.0
      %v705 = vand.u32 %v241, 4294901760
      %706 = vmatprep.mubr.f32.mxu0 %v705
      %v707 = vand.u32 %v218, 4294901760
      %708 = vmatmul.mubr.f32.gmra.mrb[0].mxu0 %v707
      %v709 = vpop.f32.mrb[0].mxu0
      %v710 = vadd.f32 %v614, %v709
      %v711 = vpop.f32.mrb[0].mxu0
      %712 = vdwg.mxu0
      %v713 = vand.u32 %v233, 4294901760
      %714 = vmatprep.subr.mxu0 %v713
      %v715 = vand.u32 %v232, 4294901760
      %716 = vmatpush1.xpose.msra.mxu0 %v715
      %v717 = vand.u32 %v235, 4294901760
      %718 = vmatprep.subr.mxu0 %v717
      %v719 = vand.u32 %v234, 4294901760
      %720 = vmatpush1.xpose.msra.mxu0 %v719
      %v721 = vand.u32 %v237, 4294901760
      %722 = vmatprep.subr.mxu0 %v721
      %v723 = vand.u32 %v236, 4294901760
      %724 = vmatpush1.xpose.msra.mxu0 %v723
      %v725 = vand.u32 %v239, 4294901760
      %726 = vmatprep.subr.mxu0 %v725
      %v727 = vand.u32 %v238, 4294901760
      %728 = vmatpush1.xpose.msra.mxu0 %v727
      %729 = vmatprep.subr.mxu0 0.0
      %730 = vmatpush1.xpose.msra.mxu0 0.0
      %731 = vmatprep.subr.mxu0 0.0
      %732 = vmatpush1.xpose.msra.mxu0 0.0
      %733 = vmatprep.subr.mxu0 0.0
      %734 = vmatpush1.xpose.msra.mxu0 0.0
      %735 = vmatprep.subr.mxu0 0.0
      %736 = vmatpush1.xpose.msra.mxu0 0.0
      %737 = vmatprep.subr.mxu0 0.0
      %738 = vmatpush1.xpose.msra.mxu0 0.0
      %739 = vmatprep.subr.mxu0 0.0
      %740 = vmatpush1.xpose.msra.mxu0 0.0
      %741 = vmatprep.subr.mxu0 0.0
      %742 = vmatpush1.xpose.msra.mxu0 0.0
      %743 = vmatprep.subr.mxu0 0.0
      %744 = vmatpush1.xpose.msra.mxu0 0.0
      %745 = vmatprep.subr.mxu0 0.0
      %746 = vmatpush1.xpose.msra.mxu0 0.0
      %747 = vmatprep.subr.mxu0 0.0
      %748 = vmatpush1.xpose.msra.mxu0 0.0
      %749 = vmatprep.subr.mxu0 0.0
      %750 = vmatpush1.xpose.msra.mxu0 0.0
      %751 = vmatprep.subr.mxu0 0.0
      %752 = vmatpush1.xpose.msra.mxu0 0.0
      %753 = vmatprep.subr.mxu0 0.0
      %754 = vmatpush1.xpose.msra.mxu0 0.0
      %755 = vmatprep.subr.mxu0 0.0
      %756 = vmatpush1.xpose.msra.mxu0 0.0
      %757 = vmatprep.subr.mxu0 0.0
      %758 = vmatpush1.xpose.msra.mxu0 0.0
      %759 = vmatprep.subr.mxu0 0.0
      %760 = vmatpush1.xpose.msra.mxu0 0.0
      %761 = vmatprep.subr.mxu0 0.0
      %762 = vmatpush1.xpose.msra.mxu0 0.0
      %763 = vmatprep.subr.mxu0 0.0
      %764 = vmatpush1.xpose.msra.mxu0 0.0
      %765 = vmatprep.subr.mxu0 0.0
      %766 = vmatpush1.xpose.msra.mxu0 0.0
      %767 = vmatprep.subr.mxu0 0.0
      %768 = vmatpush1.xpose.msra.mxu0 0.0
      %769 = vmatprep.subr.mxu0 0.0
      %770 = vmatpush1.xpose.msra.mxu0 0.0
      %771 = vmatprep.subr.mxu0 0.0
      %772 = vmatpush1.xpose.msra.mxu0 0.0
      %773 = vmatprep.subr.mxu0 0.0
      %774 = vmatpush1.xpose.msra.mxu0 0.0
      %775 = vmatprep.subr.mxu0 0.0
      %776 = vmatpush1.xpose.msra.mxu0 0.0
      %777 = vmatprep.subr.mxu0 0.0
      %778 = vmatpush1.xpose.msra.mxu0 0.0
      %779 = vmatprep.subr.mxu0 0.0
      %780 = vmatpush1.xpose.msra.mxu0 0.0
      %781 = vmatprep.subr.mxu0 0.0
      %782 = vmatpush1.xpose.msra.mxu0 0.0
      %783 = vmatprep.subr.mxu0 0.0
      %784 = vmatpush1.xpose.msra.mxu0 0.0
      %v785 = vand.u32 %v241, 4294901760
      %786 = vmatprep.mubr.f32.mxu0 %v785
      %v787 = vand.u32 %v218, 4294901760
      %788 = vmatmul.mubr.f32.gmra.mrb[0].mxu0 %v787
      %v789 = vpop.f32.mrb[0].mxu0
      %v790 = vadd.f32 %v710, %v789
      %v791 = vpop.f32.mrb[0].mxu0
      %792 = vdwg.mxu0
      %v793 = vlaneseq
      %v794 = vshrl.u32 %v793, 7
      %v795 = vsub.s32 0, %v794
      %v796 = vrot.slane %v223, %v795
      %vm797 = vcmask 261120
      %v799 = vsel %vm797, %v790, 0
      %801 = vmatprep.subr.mxu0 0.0
      %v802 = vand.u32 %v219, 4294901760
      %803 = vmatpush1.msra.mxu0 %v802
      %804 = vmatprep.subr.mxu0 0.0
      %v805 = vand.u32 %v220, 4294901760
      %806 = vmatpush1.msra.mxu0 %v805
      %807 = vmatprep.subr.mxu0 0.0
      %v808 = vand.u32 %v221, 4294901760
      %809 = vmatpush1.msra.mxu0 %v808
      %810 = vmatprep.subr.mxu0 0.0
      %v811 = vand.u32 %v222, 4294901760
      %812 = vmatpush1.msra.mxu0 %v811
      %813 = vmatprep.subr.mxu0 0.0
      %814 = vmatpush1.msra.mxu0 0.0
      %815 = vmatprep.subr.mxu0 0.0
      %816 = vmatpush1.msra.mxu0 0.0
      %817 = vmatprep.subr.mxu0 0.0
      %818 = vmatpush1.msra.mxu0 0.0
      %819 = vmatprep.subr.mxu0 0.0
      %820 = vmatpush1.msra.mxu0 0.0
      %821 = vmatprep.subr.mxu0 0.0
      %822 = vmatpush1.msra.mxu0 0.0
      %823 = vmatprep.subr.mxu0 0.0
      %824 = vmatpush1.msra.mxu0 0.0
      %825 = vmatprep.subr.mxu0 0.0
      %826 = vmatpush1.msra.mxu0 0.0
      %827 = vmatprep.subr.mxu0 0.0
      %828 = vmatpush1.msra.mxu0 0.0
      %829 = vmatprep.subr.mxu0 0.0
      %830 = vmatpush1.msra.mxu0 0.0
      %831 = vmatprep.subr.mxu0 0.0
      %832 = vmatpush1.msra.mxu0 0.0
      %833 = vmatprep.subr.mxu0 0.0
      %834 = vmatpush1.msra.mxu0 0.0
      %835 = vmatprep.subr.mxu0 0.0
      %836 = vmatpush1.msra.mxu0 0.0
      %837 = vmatprep.subr.mxu0 0.0
      %838 = vmatpush1.msra.mxu0 0.0
      %839 = vmatprep.subr.mxu0 0.0
      %840 = vmatpush1.msra.mxu0 0.0
      %841 = vmatprep.subr.mxu0 0.0
      %842 = vmatpush1.msra.mxu0 0.0
      %843 = vmatprep.subr.mxu0 0.0
      %844 = vmatpush1.msra.mxu0 0.0
      %845 = vmatprep.subr.mxu0 0.0
      %846 = vmatpush1.msra.mxu0 0.0
      %847 = vmatprep.subr.mxu0 0.0
      %848 = vmatpush1.msra.mxu0 0.0
      %849 = vmatprep.subr.mxu0 0.0
      %850 = vmatpush1.msra.mxu0 0.0
      %851 = vmatprep.subr.mxu0 0.0
      %852 = vmatpush1.msra.mxu0 0.0
      %853 = vmatprep.subr.mxu0 0.0
      %854 = vmatpush1.msra.mxu0 0.0
      %855 = vmatprep.subr.mxu0 0.0
      %856 = vmatpush1.msra.mxu0 0.0
      %857 = vmatprep.subr.mxu0 0.0
      %858 = vmatpush1.msra.mxu0 0.0
      %859 = vmatprep.subr.mxu0 0.0
      %860 = vmatpush1.msra.mxu0 0.0
      %861 = vmatprep.subr.mxu0 0.0
      %862 = vmatpush1.msra.mxu0 0.0
      %863 = vmatprep.subr.mxu0 0.0
      %864 = vmatpush1.msra.mxu0 0.0
      %865 = vmatprep.subr.mxu0 0.0
      %866 = vmatpush1.msra.mxu0 0.0
      %867 = vmatprep.subr.mxu0 0.0
      %868 = vmatpush1.msra.mxu0 0.0
      %869 = vmatprep.mubr.f32.mxu0 0.0
      %v870 = vand.u32 %v799, 4294901760
      %v871 = vsub.f32 %v799, %v870
      %v872 = vand.u32 %v871, 4294901760
      %v873 = vsub.f32 %v871, %v872
      %v874 = vand.u32 %v873, 4294901760
      %875 = vmatmul.mubr.f32.gmra.mrb[0].mxu0 %v874
      %v876 = vpop.f32.mrb[0].mxu0
      %v877 = vadd.f32 %v796, %v876
      %v878 = vpop.f32.mrb[0].mxu0
      %879 = vdwg.mxu0
      %880 = vmatprep.subr.mxu0 0.0
      %v881 = vand.u32 %v219, 4294901760
      %v882 = vsub.f32 %v219, %v881
      %v883 = vand.u32 %v882, 4294901760
      %v884 = vsub.f32 %v882, %v883
      %v885 = vand.u32 %v884, 4294901760
      %886 = vmatpush1.msra.mxu0 %v885
      %887 = vmatprep.subr.mxu0 0.0
      %v888 = vand.u32 %v220, 4294901760
      %v889 = vsub.f32 %v220, %v888
      %v890 = vand.u32 %v889, 4294901760
      %v891 = vsub.f32 %v889, %v890
      %v892 = vand.u32 %v891, 4294901760
      %893 = vmatpush1.msra.mxu0 %v892
      %894 = vmatprep.subr.mxu0 0.0
      %v895 = vand.u32 %v221, 4294901760
      %v896 = vsub.f32 %v221, %v895
      %v897 = vand.u32 %v896, 4294901760
      %v898 = vsub.f32 %v896, %v897
      %v899 = vand.u32 %v898, 4294901760
      %900 = vmatpush1.msra.mxu0 %v899
      %901 = vmatprep.subr.mxu0 0.0
      %v902 = vand.u32 %v222, 4294901760
      %v903 = vsub.f32 %v222, %v902
      %v904 = vand.u32 %v903, 4294901760
      %v905 = vsub.f32 %v903, %v904
      %v906 = vand.u32 %v905, 4294901760
      %907 = vmatpush1.msra.mxu0 %v906
      %908 = vmatprep.subr.mxu0 0.0
      %909 = vmatpush1.msra.mxu0 0.0
      %910 = vmatprep.subr.mxu0 0.0
      %911 = vmatpush1.msra.mxu0 0.0
      %912 = vmatprep.subr.mxu0 0.0
      %913 = vmatpush1.msra.mxu0 0.0
      %914 = vmatprep.subr.mxu0 0.0
      %915 = vmatpush1.msra.mxu0 0.0
      %916 = vmatprep.subr.mxu0 0.0
      %917 = vmatpush1.msra.mxu0 0.0
      %918 = vmatprep.subr.mxu0 0.0
      %919 = vmatpush1.msra.mxu0 0.0
      %920 = vmatprep.subr.mxu0 0.0
      %921 = vmatpush1.msra.mxu0 0.0
      %922 = vmatprep.subr.mxu0 0.0
      %923 = vmatpush1.msra.mxu0 0.0
      %924 = vmatprep.subr.mxu0 0.0
      %925 = vmatpush1.msra.mxu0 0.0
      %926 = vmatprep.subr.mxu0 0.0
      %927 = vmatpush1.msra.mxu0 0.0
      %928 = vmatprep.subr.mxu0 0.0
      %929 = vmatpush1.msra.mxu0 0.0
      %930 = vmatprep.subr.mxu0 0.0
      %931 = vmatpush1.msra.mxu0 0.0
      %932 = vmatprep.subr.mxu0 0.0
      %933 = vmatpush1.msra.mxu0 0.0
      %934 = vmatprep.subr.mxu0 0.0
      %935 = vmatpush1.msra.mxu0 0.0
      %936 = vmatprep.subr.mxu0 0.0
      %937 = vmatpush1.msra.mxu0 0.0
      %938 = vmatprep.subr.mxu0 0.0
      %939 = vmatpush1.msra.mxu0 0.0
      %940 = vmatprep.subr.mxu0 0.0
      %941 = vmatpush1.msra.mxu0 0.0
      %942 = vmatprep.subr.mxu0 0.0
      %943 = vmatpush1.msra.mxu0 0.0
      %944 = vmatprep.subr.mxu0 0.0
      %945 = vmatpush1.msra.mxu0 0.0
      %946 = vmatprep.subr.mxu0 0.0
      %947 = vmatpush1.msra.mxu0 0.0
      %948 = vmatprep.subr.mxu0 0.0
      %949 = vmatpush1.msra.mxu0 0.0
      %950 = vmatprep.subr.mxu0 0.0
      %951 = vmatpush1.msra.mxu0 0.0
      %952 = vmatprep.subr.mxu0 0.0
      %953 = vmatpush1.msra.mxu0 0.0
      %954 = vmatprep.subr.mxu0 0.0
      %955 = vmatpush1.msra.mxu0 0.0
      %956 = vmatprep.subr.mxu0 0.0
      %957 = vmatpush1.msra.mxu0 0.0
      %958 = vmatprep.subr.mxu0 0.0
      %959 = vmatpush1.msra.mxu0 0.0
      %960 = vmatprep.subr.mxu0 0.0
      %961 = vmatpush1.msra.mxu0 0.0
      %962 = vmatprep.subr.mxu0 0.0
      %963 = vmatpush1.msra.mxu0 0.0
      %964 = vmatprep.mubr.f32.mxu0 0.0
      %v965 = vand.u32 %v799, 4294901760
      %966 = vmatmul.mubr.f32.gmra.mrb[0].mxu0 %v965
      %v967 = vpop.f32.mrb[0].mxu0
      %v968 = vadd.f32 %v877, %v967
      %v969 = vpop.f32.mrb[0].mxu0
      %970 = vdwg.mxu0
      %971 = vmatprep.subr.mxu0 0.0
      %v972 = vand.u32 %v219, 4294901760
      %v973 = vsub.f32 %v219, %v972
      %974 = vmatpush1.msra.mxu0 %v973
      %975 = vmatprep.subr.mxu0 0.0
      %v976 = vand.u32 %v220, 4294901760
      %v977 = vsub.f32 %v220, %v976
      %978 = vmatpush1.msra.mxu0 %v977
      %979 = vmatprep.subr.mxu0 0.0
      %v980 = vand.u32 %v221, 4294901760
      %v981 = vsub.f32 %v221, %v980
      %982 = vmatpush1.msra.mxu0 %v981
      %983 = vmatprep.subr.mxu0 0.0
      %v984 = vand.u32 %v222, 4294901760
      %v985 = vsub.f32 %v222, %v984
      %986 = vmatpush1.msra.mxu0 %v985
      %987 = vmatprep.subr.mxu0 0.0
      %988 = vmatpush1.msra.mxu0 0.0
      %989 = vmatprep.subr.mxu0 0.0
      %990 = vmatpush1.msra.mxu0 0.0
      %991 = vmatprep.subr.mxu0 0.0
      %992 = vmatpush1.msra.mxu0 0.0
      %993 = vmatprep.subr.mxu0 0.0
      %994 = vmatpush1.msra.mxu0 0.0
      %995 = vmatprep.subr.mxu0 0.0
      %996 = vmatpush1.msra.mxu0 0.0
      %997 = vmatprep.subr.mxu0 0.0
      %998 = vmatpush1.msra.mxu0 0.0
      %999 = vmatprep.subr.mxu0 0.0
      %1000 = vmatpush1.msra.mxu0 0.0
      %1001 = vmatprep.subr.mxu0 0.0
      %1002 = vmatpush1.msra.mxu0 0.0
      %1003 = vmatprep.subr.mxu0 0.0
      %1004 = vmatpush1.msra.mxu0 0.0
      %1005 = vmatprep.subr.mxu0 0.0
      %1006 = vmatpush1.msra.mxu0 0.0
      %1007 = vmatprep.subr.mxu0 0.0
      %1008 = vmatpush1.msra.mxu0 0.0
      %1009 = vmatprep.subr.mxu0 0.0
      %1010 = vmatpush1.msra.mxu0 0.0
      %1011 = vmatprep.subr.mxu0 0.0
      %1012 = vmatpush1.msra.mxu0 0.0
      %1013 = vmatprep.subr.mxu0 0.0
      %1014 = vmatpush1.msra.mxu0 0.0
      %1015 = vmatprep.subr.mxu0 0.0
      %1016 = vmatpush1.msra.mxu0 0.0
      %1017 = vmatprep.subr.mxu0 0.0
      %1018 = vmatpush1.msra.mxu0 0.0
      %1019 = vmatprep.subr.mxu0 0.0
      %1020 = vmatpush1.msra.mxu0 0.0
      %1021 = vmatprep.subr.mxu0 0.0
      %1022 = vmatpush1.msra.mxu0 0.0
      %1023 = vmatprep.subr.mxu0 0.0
      %1024 = vmatpush1.msra.mxu0 0.0
      %1025 = vmatprep.subr.mxu0 0.0
      %1026 = vmatpush1.msra.mxu0 0.0
      %1027 = vmatprep.subr.mxu0 0.0
      %1028 = vmatpush1.msra.mxu0 0.0
      %1029 = vmatprep.subr.mxu0 0.0
      %1030 = vmatpush1.msra.mxu0 0.0
      %1031 = vmatprep.subr.mxu0 0.0
      %1032 = vmatpush1.msra.mxu0 0.0
      %1033 = vmatprep.subr.mxu0 0.0
      %1034 = vmatpush1.msra.mxu0 0.0
      %1035 = vmatprep.subr.mxu0 0.0
      %1036 = vmatpush1.msra.mxu0 0.0
      %1037 = vmatprep.subr.mxu0 0.0
      %1038 = vmatpush1.msra.mxu0 0.0
      %1039 = vmatprep.subr.mxu0 0.0
      %1040 = vmatpush1.msra.mxu0 0.0
      %1041 = vmatprep.subr.mxu0 0.0
      %1042 = vmatpush1.msra.mxu0 0.0
      %1043 = vmatprep.mubr.f32.mxu0 0.0
      %v1044 = vand.u32 %v799, 4294901760
      %v1045 = vsub.f32 %v799, %v1044
      %1046 = vmatmul.mubr.f32.gmra.mrb[0].mxu0 %v1045
      %v1047 = vpop.f32.mrb[0].mxu0
      %v1048 = vadd.f32 %v968, %v1047
      %v1049 = vpop.f32.mrb[0].mxu0
      %1050 = vdwg.mxu0
      %1051 = vmatprep.subr.mxu0 0.0
      %v1052 = vand.u32 %v219, 4294901760
      %1053 = vmatpush1.msra.mxu0 %v1052
      %1054 = vmatprep.subr.mxu0 0.0
      %v1055 = vand.u32 %v220, 4294901760
      %1056 = vmatpush1.msra.mxu0 %v1055
      %1057 = vmatprep.subr.mxu0 0.0
      %v1058 = vand.u32 %v221, 4294901760
      %1059 = vmatpush1.msra.mxu0 %v1058
      %1060 = vmatprep.subr.mxu0 0.0
      %v1061 = vand.u32 %v222, 4294901760
      %1062 = vmatpush1.msra.mxu0 %v1061
      %1063 = vmatprep.subr.mxu0 0.0
      %1064 = vmatpush1.msra.mxu0 0.0
      %1065 = vmatprep.subr.mxu0 0.0
      %1066 = vmatpush1.msra.mxu0 0.0
      %1067 = vmatprep.subr.mxu0 0.0
      %1068 = vmatpush1.msra.mxu0 0.0
      %1069 = vmatprep.subr.mxu0 0.0
      %1070 = vmatpush1.msra.mxu0 0.0
      %1071 = vmatprep.subr.mxu0 0.0
      %1072 = vmatpush1.msra.mxu0 0.0
      %1073 = vmatprep.subr.mxu0 0.0
      %1074 = vmatpush1.msra.mxu0 0.0
      %1075 = vmatprep.subr.mxu0 0.0
      %1076 = vmatpush1.msra.mxu0 0.0
      %1077 = vmatprep.subr.mxu0 0.0
      %1078 = vmatpush1.msra.mxu0 0.0
      %1079 = vmatprep.subr.mxu0 0.0
      %1080 = vmatpush1.msra.mxu0 0.0
      %1081 = vmatprep.subr.mxu0 0.0
      %1082 = vmatpush1.msra.mxu0 0.0
      %1083 = vmatprep.subr.mxu0 0.0
      %1084 = vmatpush1.msra.mxu0 0.0
      %1085 = vmatprep.subr.mxu0 0.0
      %1086 = vmatpush1.msra.mxu0 0.0
      %1087 = vmatprep.subr.mxu0 0.0
      %1088 = vmatpush1.msra.mxu0 0.0
      %1089 = vmatprep.subr.mxu0 0.0
      %1090 = vmatpush1.msra.mxu0 0.0
      %1091 = vmatprep.subr.mxu0 0.0
      %1092 = vmatpush1.msra.mxu0 0.0
      %1093 = vmatprep.subr.mxu0 0.0
      %1094 = vmatpush1.msra.mxu0 0.0
      %1095 = vmatprep.subr.mxu0 0.0
      %1096 = vmatpush1.msra.mxu0 0.0
      %1097 = vmatprep.subr.mxu0 0.0
      %1098 = vmatpush1.msra.mxu0 0.0
      %1099 = vmatprep.subr.mxu0 0.0
      %1100 = vmatpush1.msra.mxu0 0.0
      %1101 = vmatprep.subr.mxu0 0.0
      %1102 = vmatpush1.msra.mxu0 0.0
      %1103 = vmatprep.subr.mxu0 0.0
      %1104 = vmatpush1.msra.mxu0 0.0
      %1105 = vmatprep.subr.mxu0 0.0
      %1106 = vmatpush1.msra.mxu0 0.0
      %1107 = vmatprep.subr.mxu0 0.0
      %1108 = vmatpush1.msra.mxu0 0.0
      %1109 = vmatprep.subr.mxu0 0.0
      %1110 = vmatpush1.msra.mxu0 0.0
      %1111 = vmatprep.subr.mxu0 0.0
      %1112 = vmatpush1.msra.mxu0 0.0
      %1113 = vmatprep.subr.mxu0 0.0
      %1114 = vmatpush1.msra.mxu0 0.0
      %1115 = vmatprep.subr.mxu0 0.0
      %1116 = vmatpush1.msra.mxu0 0.0
      %1117 = vmatprep.subr.mxu0 0.0
      %1118 = vmatpush1.msra.mxu0 0.0
      %1119 = vmatprep.mubr.f32.mxu0 0.0
      %v1120 = vand.u32 %v799, 4294901760
      %v1121 = vsub.f32 %v799, %v1120
      %v1122 = vand.u32 %v1121, 4294901760
      %1123 = vmatmul.mubr.f32.gmra.mrb[0].mxu0 %v1122
      %v1124 = vpop.f32.mrb[0].mxu0
      %v1125 = vadd.f32 %v1048, %v1124
      %v1126 = vpop.f32.mrb[0].mxu0
      %1127 = vdwg.mxu0
      %1128 = vmatprep.subr.mxu0 0.0
      %v1129 = vand.u32 %v219, 4294901760
      %v1130 = vsub.f32 %v219, %v1129
      %v1131 = vand.u32 %v1130, 4294901760
      %1132 = vmatpush1.msra.mxu0 %v1131
      %1133 = vmatprep.subr.mxu0 0.0
      %v1134 = vand.u32 %v220, 4294901760
      %v1135 = vsub.f32 %v220, %v1134
      %v1136 = vand.u32 %v1135, 4294901760
      %1137 = vmatpush1.msra.mxu0 %v1136
      %1138 = vmatprep.subr.mxu0 0.0
      %v1139 = vand.u32 %v221, 4294901760
      %v1140 = vsub.f32 %v221, %v1139
      %v1141 = vand.u32 %v1140, 4294901760
      %1142 = vmatpush1.msra.mxu0 %v1141
      %1143 = vmatprep.subr.mxu0 0.0
      %v1144 = vand.u32 %v222, 4294901760
      %v1145 = vsub.f32 %v222, %v1144
      %v1146 = vand.u32 %v1145, 4294901760
      %1147 = vmatpush1.msra.mxu0 %v1146
      %1148 = vmatprep.subr.mxu0 0.0
      %1149 = vmatpush1.msra.mxu0 0.0
      %1150 = vmatprep.subr.mxu0 0.0
      %1151 = vmatpush1.msra.mxu0 0.0
      %1152 = vmatprep.subr.mxu0 0.0
      %1153 = vmatpush1.msra.mxu0 0.0
      %1154 = vmatprep.subr.mxu0 0.0
      %1155 = vmatpush1.msra.mxu0 0.0
      %1156 = vmatprep.subr.mxu0 0.0
      %1157 = vmatpush1.msra.mxu0 0.0
      %1158 = vmatprep.subr.mxu0 0.0
      %1159 = vmatpush1.msra.mxu0 0.0
      %1160 = vmatprep.subr.mxu0 0.0
      %1161 = vmatpush1.msra.mxu0 0.0
      %1162 = vmatprep.subr.mxu0 0.0
      %1163 = vmatpush1.msra.mxu0 0.0
      %1164 = vmatprep.subr.mxu0 0.0
      %1165 = vmatpush1.msra.mxu0 0.0
      %1166 = vmatprep.subr.mxu0 0.0
      %1167 = vmatpush1.msra.mxu0 0.0
      %1168 = vmatprep.subr.mxu0 0.0
      %1169 = vmatpush1.msra.mxu0 0.0
      %1170 = vmatprep.subr.mxu0 0.0
      %1171 = vmatpush1.msra.mxu0 0.0
      %1172 = vmatprep.subr.mxu0 0.0
      %1173 = vmatpush1.msra.mxu0 0.0
      %1174 = vmatprep.subr.mxu0 0.0
      %1175 = vmatpush1.msra.mxu0 0.0
      %1176 = vmatprep.subr.mxu0 0.0
      %1177 = vmatpush1.msra.mxu0 0.0
      %1178 = vmatprep.subr.mxu0 0.0
      %1179 = vmatpush1.msra.mxu0 0.0
      %1180 = vmatprep.subr.mxu0 0.0
      %1181 = vmatpush1.msra.mxu0 0.0
      %1182 = vmatprep.subr.mxu0 0.0
      %1183 = vmatpush1.msra.mxu0 0.0
      %1184 = vmatprep.subr.mxu0 0.0
      %1185 = vmatpush1.msra.mxu0 0.0
      %1186 = vmatprep.subr.mxu0 0.0
      %1187 = vmatpush1.msra.mxu0 0.0
      %1188 = vmatprep.subr.mxu0 0.0
      %1189 = vmatpush1.msra.mxu0 0.0
      %1190 = vmatprep.subr.mxu0 0.0
      %1191 = vmatpush1.msra.mxu0 0.0
      %1192 = vmatprep.subr.mxu0 0.0
      %1193 = vmatpush1.msra.mxu0 0.0
      %1194 = vmatprep.subr.mxu0 0.0
      %1195 = vmatpush1.msra.mxu0 0.0
      %1196 = vmatprep.subr.mxu0 0.0
      %1197 = vmatpush1.msra.mxu0 0.0
      %1198 = vmatprep.subr.mxu0 0.0
      %1199 = vmatpush1.msra.mxu0 0.0
      %1200 = vmatprep.subr.mxu0 0.0
      %1201 = vmatpush1.msra.mxu0 0.0
      %1202 = vmatprep.subr.mxu0 0.0
      %1203 = vmatpush1.msra.mxu0 0.0
      %1204 = vmatprep.mubr.f32.mxu0 0.0
      %v1205 = vand.u32 %v799, 4294901760
      %1206 = vmatmul.mubr.f32.gmra.mrb[0].mxu0 %v1205
      %v1207 = vpop.f32.mrb[0].mxu0
      %v1208 = vadd.f32 %v1125, %v1207
      %v1209 = vpop.f32.mrb[0].mxu0
      %1210 = vdwg.mxu0
      %1211 = vmatprep.subr.mxu0 0.0
      %v1212 = vand.u32 %v219, 4294901760
      %1213 = vmatpush1.msra.mxu0 %v1212
      %1214 = vmatprep.subr.mxu0 0.0
      %v1215 = vand.u32 %v220, 4294901760
      %1216 = vmatpush1.msra.mxu0 %v1215
      %1217 = vmatprep.subr.mxu0 0.0
      %v1218 = vand.u32 %v221, 4294901760
      %1219 = vmatpush1.msra.mxu0 %v1218
      %1220 = vmatprep.subr.mxu0 0.0
      %v1221 = vand.u32 %v222, 4294901760
      %1222 = vmatpush1.msra.mxu0 %v1221
      %1223 = vmatprep.subr.mxu0 0.0
      %1224 = vmatpush1.msra.mxu0 0.0
      %1225 = vmatprep.subr.mxu0 0.0
      %1226 = vmatpush1.msra.mxu0 0.0
      %1227 = vmatprep.subr.mxu0 0.0
      %1228 = vmatpush1.msra.mxu0 0.0
      %1229 = vmatprep.subr.mxu0 0.0
      %1230 = vmatpush1.msra.mxu0 0.0
      %1231 = vmatprep.subr.mxu0 0.0
      %1232 = vmatpush1.msra.mxu0 0.0
      %1233 = vmatprep.subr.mxu0 0.0
      %1234 = vmatpush1.msra.mxu0 0.0
      %1235 = vmatprep.subr.mxu0 0.0
      %1236 = vmatpush1.msra.mxu0 0.0
      %1237 = vmatprep.subr.mxu0 0.0
      %1238 = vmatpush1.msra.mxu0 0.0
      %1239 = vmatprep.subr.mxu0 0.0
      %1240 = vmatpush1.msra.mxu0 0.0
      %1241 = vmatprep.subr.mxu0 0.0
      %1242 = vmatpush1.msra.mxu0 0.0
      %1243 = vmatprep.subr.mxu0 0.0
      %1244 = vmatpush1.msra.mxu0 0.0
      %1245 = vmatprep.subr.mxu0 0.0
      %1246 = vmatpush1.msra.mxu0 0.0
      %1247 = vmatprep.subr.mxu0 0.0
      %1248 = vmatpush1.msra.mxu0 0.0
      %1249 = vmatprep.subr.mxu0 0.0
      %1250 = vmatpush1.msra.mxu0 0.0
      %1251 = vmatprep.subr.mxu0 0.0
      %1252 = vmatpush1.msra.mxu0 0.0
      %1253 = vmatprep.subr.mxu0 0.0
      %1254 = vmatpush1.msra.mxu0 0.0
      %1255 = vmatprep.subr.mxu0 0.0
      %1256 = vmatpush1.msra.mxu0 0.0
      %1257 = vmatprep.subr.mxu0 0.0
      %1258 = vmatpush1.msra.mxu0 0.0
      %1259 = vmatprep.subr.mxu0 0.0
      %1260 = vmatpush1.msra.mxu0 0.0
      %1261 = vmatprep.subr.mxu0 0.0
      %1262 = vmatpush1.msra.mxu0 0.0
      %1263 = vmatprep.subr.mxu0 0.0
      %1264 = vmatpush1.msra.mxu0 0.0
      %1265 = vmatprep.subr.mxu0 0.0
      %1266 = vmatpush1.msra.mxu0 0.0
      %1267 = vmatprep.subr.mxu0 0.0
      %1268 = vmatpush1.msra.mxu0 0.0
      %1269 = vmatprep.subr.mxu0 0.0
      %1270 = vmatpush1.msra.mxu0 0.0
      %1271 = vmatprep.subr.mxu0 0.0
      %1272 = vmatpush1.msra.mxu0 0.0
      %1273 = vmatprep.subr.mxu0 0.0
      %1274 = vmatpush1.msra.mxu0 0.0
      %1275 = vmatprep.subr.mxu0 0.0
      %1276 = vmatpush1.msra.mxu0 0.0
      %1277 = vmatprep.subr.mxu0 0.0
      %1278 = vmatpush1.msra.mxu0 0.0
      %1279 = vmatprep.mubr.f32.mxu0 0.0
      %v1280 = vand.u32 %v799, 4294901760
      %1281 = vmatmul.mubr.f32.gmra.mrb[0].mxu0 %v1280
      %v1282 = vpop.f32.mrb[0].mxu0
      %v1283 = vadd.f32 %v1208, %v1282
      %v1284 = vpop.f32.mrb[0].mxu0
      %1285 = vdwg.mxu0
      %1287 = vset.pattern.permute.xlu0 32
      %1288 = vperm.xlu0 %1287, %v1283
      %v1289 = vpop.permute.xlu0 %1288
      %v1291 = vsel %vm797, %v1283, 0
      %v1293 = vand.u32 %v225, 4294901760
      %1294 = vmatprep.subr.mxu0 %v1293
      %v1295 = vand.u32 %v224, 4294901760
      %1296 = vmatpush1.msra.mxu0 %v1295
      %v1297 = vand.u32 %v227, 4294901760
      %1298 = vmatprep.subr.mxu0 %v1297
      %v1299 = vand.u32 %v226, 4294901760
      %1300 = vmatpush1.msra.mxu0 %v1299
      %v1301 = vand.u32 %v229, 4294901760
      %1302 = vmatprep.subr.mxu0 %v1301
      %v1303 = vand.u32 %v228, 4294901760
      %1304 = vmatpush1.msra.mxu0 %v1303
      %v1305 = vand.u32 %v231, 4294901760
      %1306 = vmatprep.subr.mxu0 %v1305
      %v1307 = vand.u32 %v230, 4294901760
      %1308 = vmatpush1.msra.mxu0 %v1307
      %1309 = vmatprep.subr.mxu0 0.0
      %1310 = vmatpush1.msra.mxu0 0.0
      %1311 = vmatprep.subr.mxu0 0.0
      %1312 = vmatpush1.msra.mxu0 0.0
      %1313 = vmatprep.subr.mxu0 0.0
      %1314 = vmatpush1.msra.mxu0 0.0
      %1315 = vmatprep.subr.mxu0 0.0
      %1316 = vmatpush1.msra.mxu0 0.0
      %1317 = vmatprep.subr.mxu0 0.0
      %1318 = vmatpush1.msra.mxu0 0.0
      %1319 = vmatprep.subr.mxu0 0.0
      %1320 = vmatpush1.msra.mxu0 0.0
      %1321 = vmatprep.subr.mxu0 0.0
      %1322 = vmatpush1.msra.mxu0 0.0
      %1323 = vmatprep.subr.mxu0 0.0
      %1324 = vmatpush1.msra.mxu0 0.0
      %1325 = vmatprep.subr.mxu0 0.0
      %1326 = vmatpush1.msra.mxu0 0.0
      %1327 = vmatprep.subr.mxu0 0.0
      %1328 = vmatpush1.msra.mxu0 0.0
      %1329 = vmatprep.subr.mxu0 0.0
      %1330 = vmatpush1.msra.mxu0 0.0
      %1331 = vmatprep.subr.mxu0 0.0
      %1332 = vmatpush1.msra.mxu0 0.0
      %1333 = vmatprep.subr.mxu0 0.0
      %1334 = vmatpush1.msra.mxu0 0.0
      %1335 = vmatprep.subr.mxu0 0.0
      %1336 = vmatpush1.msra.mxu0 0.0
      %1337 = vmatprep.subr.mxu0 0.0
      %1338 = vmatpush1.msra.mxu0 0.0
      %1339 = vmatprep.subr.mxu0 0.0
      %1340 = vmatpush1.msra.mxu0 0.0
      %1341 = vmatprep.subr.mxu0 0.0
      %1342 = vmatpush1.msra.mxu0 0.0
      %1343 = vmatprep.subr.mxu0 0.0
      %1344 = vmatpush1.msra.mxu0 0.0
      %1345 = vmatprep.subr.mxu0 0.0
      %1346 = vmatpush1.msra.mxu0 0.0
      %1347 = vmatprep.subr.mxu0 0.0
      %1348 = vmatpush1.msra.mxu0 0.0
      %1349 = vmatprep.subr.mxu0 0.0
      %1350 = vmatpush1.msra.mxu0 0.0
      %1351 = vmatprep.subr.mxu0 0.0
      %1352 = vmatpush1.msra.mxu0 0.0
      %1353 = vmatprep.subr.mxu0 0.0
      %1354 = vmatpush1.msra.mxu0 0.0
      %1355 = vmatprep.subr.mxu0 0.0
      %1356 = vmatpush1.msra.mxu0 0.0
      %1357 = vmatprep.subr.mxu0 0.0
      %1358 = vmatpush1.msra.mxu0 0.0
      %1359 = vmatprep.subr.mxu0 0.0
      %1360 = vmatpush1.msra.mxu0 0.0
      %1361 = vmatprep.subr.mxu0 0.0
      %1362 = vmatpush1.msra.mxu0 0.0
      %1363 = vmatprep.subr.mxu0 0.0
      %1364 = vmatpush1.msra.mxu0 0.0
      %1365 = vmatprep.mubr.f32.mxu0 0.0
      %v1366 = vand.u32 %v1291, 4294901760
      %v1367 = vsub.f32 %v1291, %v1366
      %v1368 = vand.u32 %v1367, 4294901760
      %v1369 = vsub.f32 %v1367, %v1368
      %v1370 = vand.u32 %v1369, 4294901760
      %1371 = vmatmul.mubr.f32.gmra.mrb[0].mxu0 %v1370
      %v1372 = vpop.f32.mrb[0].mxu0
      %v1373 = vadd.f32 %v1289, %v1372
      %v1374 = vpop.f32.mrb[0].mxu0
      %v1375 = vadd.f32 %v1289, %v1374
      %1376 = vdwg.mxu0
      %v1377 = vand.u32 %v225, 4294901760
      %v1378 = vsub.f32 %v225, %v1377
      %v1379 = vand.u32 %v1378, 4294901760
      %v1380 = vsub.f32 %v1378, %v1379
      %v1381 = vand.u32 %v1380, 4294901760
      %1382 = vmatprep.subr.mxu0 %v1381
      %v1383 = vand.u32 %v224, 4294901760
      %v1384 = vsub.f32 %v224, %v1383
      %v1385 = vand.u32 %v1384, 4294901760
      %v1386 = vsub.f32 %v1384, %v1385
      %v1387 = vand.u32 %v1386, 4294901760
      %1388 = vmatpush1.msra.mxu0 %v1387
      %v1389 = vand.u32 %v227, 4294901760
      %v1390 = vsub.f32 %v227, %v1389
      %v1391 = vand.u32 %v1390, 4294901760
      %v1392 = vsub.f32 %v1390, %v1391
      %v1393 = vand.u32 %v1392, 4294901760
      %1394 = vmatprep.subr.mxu0 %v1393
      %v1395 = vand.u32 %v226, 4294901760
      %v1396 = vsub.f32 %v226, %v1395
      %v1397 = vand.u32 %v1396, 4294901760
      %v1398 = vsub.f32 %v1396, %v1397
      %v1399 = vand.u32 %v1398, 4294901760
      %1400 = vmatpush1.msra.mxu0 %v1399
      %v1401 = vand.u32 %v229, 4294901760
      %v1402 = vsub.f32 %v229, %v1401
      %v1403 = vand.u32 %v1402, 4294901760
      %v1404 = vsub.f32 %v1402, %v1403
      %v1405 = vand.u32 %v1404, 4294901760
      %1406 = vmatprep.subr.mxu0 %v1405
      %v1407 = vand.u32 %v228, 4294901760
      %v1408 = vsub.f32 %v228, %v1407
      %v1409 = vand.u32 %v1408, 4294901760
      %v1410 = vsub.f32 %v1408, %v1409
      %v1411 = vand.u32 %v1410, 4294901760
      %1412 = vmatpush1.msra.mxu0 %v1411
      %v1413 = vand.u32 %v231, 4294901760
      %v1414 = vsub.f32 %v231, %v1413
      %v1415 = vand.u32 %v1414, 4294901760
      %v1416 = vsub.f32 %v1414, %v1415
      %v1417 = vand.u32 %v1416, 4294901760
      %1418 = vmatprep.subr.mxu0 %v1417
      %v1419 = vand.u32 %v230, 4294901760
      %v1420 = vsub.f32 %v230, %v1419
      %v1421 = vand.u32 %v1420, 4294901760
      %v1422 = vsub.f32 %v1420, %v1421
      %v1423 = vand.u32 %v1422, 4294901760
      %1424 = vmatpush1.msra.mxu0 %v1423
      %1425 = vmatprep.subr.mxu0 0.0
      %1426 = vmatpush1.msra.mxu0 0.0
      %1427 = vmatprep.subr.mxu0 0.0
      %1428 = vmatpush1.msra.mxu0 0.0
      %1429 = vmatprep.subr.mxu0 0.0
      %1430 = vmatpush1.msra.mxu0 0.0
      %1431 = vmatprep.subr.mxu0 0.0
      %1432 = vmatpush1.msra.mxu0 0.0
      %1433 = vmatprep.subr.mxu0 0.0
      %1434 = vmatpush1.msra.mxu0 0.0
      %1435 = vmatprep.subr.mxu0 0.0
      %1436 = vmatpush1.msra.mxu0 0.0
      %1437 = vmatprep.subr.mxu0 0.0
      %1438 = vmatpush1.msra.mxu0 0.0
      %1439 = vmatprep.subr.mxu0 0.0
      %1440 = vmatpush1.msra.mxu0 0.0
      %1441 = vmatprep.subr.mxu0 0.0
      %1442 = vmatpush1.msra.mxu0 0.0
      %1443 = vmatprep.subr.mxu0 0.0
      %1444 = vmatpush1.msra.mxu0 0.0
      %1445 = vmatprep.subr.mxu0 0.0
      %1446 = vmatpush1.msra.mxu0 0.0
      %1447 = vmatprep.subr.mxu0 0.0
      %1448 = vmatpush1.msra.mxu0 0.0
      %1449 = vmatprep.subr.mxu0 0.0
      %1450 = vmatpush1.msra.mxu0 0.0
      %1451 = vmatprep.subr.mxu0 0.0
      %1452 = vmatpush1.msra.mxu0 0.0
      %1453 = vmatprep.subr.mxu0 0.0
      %1454 = vmatpush1.msra.mxu0 0.0
      %1455 = vmatprep.subr.mxu0 0.0
      %1456 = vmatpush1.msra.mxu0 0.0
      %1457 = vmatprep.subr.mxu0 0.0
      %1458 = vmatpush1.msra.mxu0 0.0
      %1459 = vmatprep.subr.mxu0 0.0
      %1460 = vmatpush1.msra.mxu0 0.0
      %1461 = vmatprep.subr.mxu0 0.0
      %1462 = vmatpush1.msra.mxu0 0.0
      %1463 = vmatprep.subr.mxu0 0.0
      %1464 = vmatpush1.msra.mxu0 0.0
      %1465 = vmatprep.subr.mxu0 0.0
      %1466 = vmatpush1.msra.mxu0 0.0
      %1467 = vmatprep.subr.mxu0 0.0
      %1468 = vmatpush1.msra.mxu0 0.0
      %1469 = vmatprep.subr.mxu0 0.0
      %1470 = vmatpush1.msra.mxu0 0.0
      %1471 = vmatprep.subr.mxu0 0.0
      %1472 = vmatpush1.msra.mxu0 0.0
      %1473 = vmatprep.subr.mxu0 0.0
      %1474 = vmatpush1.msra.mxu0 0.0
      %1475 = vmatprep.subr.mxu0 0.0
      %1476 = vmatpush1.msra.mxu0 0.0
      %1477 = vmatprep.subr.mxu0 0.0
      %1478 = vmatpush1.msra.mxu0 0.0
      %1479 = vmatprep.subr.mxu0 0.0
      %1480 = vmatpush1.msra.mxu0 0.0
      %1481 = vmatprep.mubr.f32.mxu0 0.0
      %v1482 = vand.u32 %v1291, 4294901760
      %1483 = vmatmul.mubr.f32.gmra.mrb[0].mxu0 %v1482
      %v1484 = vpop.f32.mrb[0].mxu0
      %v1485 = vadd.f32 %v1373, %v1484
      %v1486 = vpop.f32.mrb[0].mxu0
      %v1487 = vadd.f32 %v1375, %v1486
      %1488 = vdwg.mxu0
      %v1489 = vand.u32 %v225, 4294901760
      %v1490 = vsub.f32 %v225, %v1489
      %1491 = vmatprep.subr.mxu0 %v1490
      %v1492 = vand.u32 %v224, 4294901760
      %v1493 = vsub.f32 %v224, %v1492
      %1494 = vmatpush1.msra.mxu0 %v1493
      %v1495 = vand.u32 %v227, 4294901760
      %v1496 = vsub.f32 %v227, %v1495
      %1497 = vmatprep.subr.mxu0 %v1496
      %v1498 = vand.u32 %v226, 4294901760
      %v1499 = vsub.f32 %v226, %v1498
      %1500 = vmatpush1.msra.mxu0 %v1499
      %v1501 = vand.u32 %v229, 4294901760
      %v1502 = vsub.f32 %v229, %v1501
      %1503 = vmatprep.subr.mxu0 %v1502
      %v1504 = vand.u32 %v228, 4294901760
      %v1505 = vsub.f32 %v228, %v1504
      %1506 = vmatpush1.msra.mxu0 %v1505
      %v1507 = vand.u32 %v231, 4294901760
      %v1508 = vsub.f32 %v231, %v1507
      %1509 = vmatprep.subr.mxu0 %v1508
      %v1510 = vand.u32 %v230, 4294901760
      %v1511 = vsub.f32 %v230, %v1510
      %1512 = vmatpush1.msra.mxu0 %v1511
      %1513 = vmatprep.subr.mxu0 0.0
      %1514 = vmatpush1.msra.mxu0 0.0
      %1515 = vmatprep.subr.mxu0 0.0
      %1516 = vmatpush1.msra.mxu0 0.0
      %1517 = vmatprep.subr.mxu0 0.0
      %1518 = vmatpush1.msra.mxu0 0.0
      %1519 = vmatprep.subr.mxu0 0.0
      %1520 = vmatpush1.msra.mxu0 0.0
      %1521 = vmatprep.subr.mxu0 0.0
      %1522 = vmatpush1.msra.mxu0 0.0
      %1523 = vmatprep.subr.mxu0 0.0
      %1524 = vmatpush1.msra.mxu0 0.0
      %1525 = vmatprep.subr.mxu0 0.0
      %1526 = vmatpush1.msra.mxu0 0.0
      %1527 = vmatprep.subr.mxu0 0.0
      %1528 = vmatpush1.msra.mxu0 0.0
      %1529 = vmatprep.subr.mxu0 0.0
      %1530 = vmatpush1.msra.mxu0 0.0
      %1531 = vmatprep.subr.mxu0 0.0
      %1532 = vmatpush1.msra.mxu0 0.0
      %1533 = vmatprep.subr.mxu0 0.0
      %1534 = vmatpush1.msra.mxu0 0.0
      %1535 = vmatprep.subr.mxu0 0.0
      %1536 = vmatpush1.msra.mxu0 0.0
      %1537 = vmatprep.subr.mxu0 0.0
      %1538 = vmatpush1.msra.mxu0 0.0
      %1539 = vmatprep.subr.mxu0 0.0
      %1540 = vmatpush1.msra.mxu0 0.0
      %1541 = vmatprep.subr.mxu0 0.0
      %1542 = vmatpush1.msra.mxu0 0.0
      %1543 = vmatprep.subr.mxu0 0.0
      %1544 = vmatpush1.msra.mxu0 0.0
      %1545 = vmatprep.subr.mxu0 0.0
      %1546 = vmatpush1.msra.mxu0 0.0
      %1547 = vmatprep.subr.mxu0 0.0
      %1548 = vmatpush1.msra.mxu0 0.0
      %1549 = vmatprep.subr.mxu0 0.0
      %1550 = vmatpush1.msra.mxu0 0.0
      %1551 = vmatprep.subr.mxu0 0.0
      %1552 = vmatpush1.msra.mxu0 0.0
      %1553 = vmatprep.subr.mxu0 0.0
      %1554 = vmatpush1.msra.mxu0 0.0
      %1555 = vmatprep.subr.mxu0 0.0
      %1556 = vmatpush1.msra.mxu0 0.0
      %1557 = vmatprep.subr.mxu0 0.0
      %1558 = vmatpush1.msra.mxu0 0.0
      %1559 = vmatprep.subr.mxu0 0.0
      %1560 = vmatpush1.msra.mxu0 0.0
      %1561 = vmatprep.subr.mxu0 0.0
      %1562 = vmatpush1.msra.mxu0 0.0
      %1563 = vmatprep.subr.mxu0 0.0
      %1564 = vmatpush1.msra.mxu0 0.0
      %1565 = vmatprep.subr.mxu0 0.0
      %1566 = vmatpush1.msra.mxu0 0.0
      %1567 = vmatprep.subr.mxu0 0.0
      %1568 = vmatpush1.msra.mxu0 0.0
      %1569 = vmatprep.mubr.f32.mxu0 0.0
      %v1570 = vand.u32 %v1291, 4294901760
      %v1571 = vsub.f32 %v1291, %v1570
      %1572 = vmatmul.mubr.f32.gmra.mrb[0].mxu0 %v1571
      %v1573 = vpop.f32.mrb[0].mxu0
      %v1574 = vadd.f32 %v1485, %v1573
      %v1575 = vpop.f32.mrb[0].mxu0
      %v1576 = vadd.f32 %v1487, %v1575
      %1577 = vdwg.mxu0
      %v1578 = vand.u32 %v225, 4294901760
      %1579 = vmatprep.subr.mxu0 %v1578
      %v1580 = vand.u32 %v224, 4294901760
      %1581 = vmatpush1.msra.mxu0 %v1580
      %v1582 = vand.u32 %v227, 4294901760
      %1583 = vmatprep.subr.mxu0 %v1582
      %v1584 = vand.u32 %v226, 4294901760
      %1585 = vmatpush1.msra.mxu0 %v1584
      %v1586 = vand.u32 %v229, 4294901760
      %1587 = vmatprep.subr.mxu0 %v1586
      %v1588 = vand.u32 %v228, 4294901760
      %1589 = vmatpush1.msra.mxu0 %v1588
      %v1590 = vand.u32 %v231, 4294901760
      %1591 = vmatprep.subr.mxu0 %v1590
      %v1592 = vand.u32 %v230, 4294901760
      %1593 = vmatpush1.msra.mxu0 %v1592
      %1594 = vmatprep.subr.mxu0 0.0
      %1595 = vmatpush1.msra.mxu0 0.0
      %1596 = vmatprep.subr.mxu0 0.0
      %1597 = vmatpush1.msra.mxu0 0.0
      %1598 = vmatprep.subr.mxu0 0.0
      %1599 = vmatpush1.msra.mxu0 0.0
      %1600 = vmatprep.subr.mxu0 0.0
      %1601 = vmatpush1.msra.mxu0 0.0
      %1602 = vmatprep.subr.mxu0 0.0
      %1603 = vmatpush1.msra.mxu0 0.0
      %1604 = vmatprep.subr.mxu0 0.0
      %1605 = vmatpush1.msra.mxu0 0.0
      %1606 = vmatprep.subr.mxu0 0.0
      %1607 = vmatpush1.msra.mxu0 0.0
      %1608 = vmatprep.subr.mxu0 0.0
      %1609 = vmatpush1.msra.mxu0 0.0
      %1610 = vmatprep.subr.mxu0 0.0
      %1611 = vmatpush1.msra.mxu0 0.0
      %1612 = vmatprep.subr.mxu0 0.0
      %1613 = vmatpush1.msra.mxu0 0.0
      %1614 = vmatprep.subr.mxu0 0.0
      %1615 = vmatpush1.msra.mxu0 0.0
      %1616 = vmatprep.subr.mxu0 0.0
      %1617 = vmatpush1.msra.mxu0 0.0
      %1618 = vmatprep.subr.mxu0 0.0
      %1619 = vmatpush1.msra.mxu0 0.0
      %1620 = vmatprep.subr.mxu0 0.0
      %1621 = vmatpush1.msra.mxu0 0.0
      %1622 = vmatprep.subr.mxu0 0.0
      %1623 = vmatpush1.msra.mxu0 0.0
      %1624 = vmatprep.subr.mxu0 0.0
      %1625 = vmatpush1.msra.mxu0 0.0
      %1626 = vmatprep.subr.mxu0 0.0
      %1627 = vmatpush1.msra.mxu0 0.0
      %1628 = vmatprep.subr.mxu0 0.0
      %1629 = vmatpush1.msra.mxu0 0.0
      %1630 = vmatprep.subr.mxu0 0.0
      %1631 = vmatpush1.msra.mxu0 0.0
      %1632 = vmatprep.subr.mxu0 0.0
      %1633 = vmatpush1.msra.mxu0 0.0
      %1634 = vmatprep.subr.mxu0 0.0
      %1635 = vmatpush1.msra.mxu0 0.0
      %1636 = vmatprep.subr.mxu0 0.0
      %1637 = vmatpush1.msra.mxu0 0.0
      %1638 = vmatprep.subr.mxu0 0.0
      %1639 = vmatpush1.msra.mxu0 0.0
      %1640 = vmatprep.subr.mxu0 0.0
      %1641 = vmatpush1.msra.mxu0 0.0
      %1642 = vmatprep.subr.mxu0 0.0
      %1643 = vmatpush1.msra.mxu0 0.0
      %1644 = vmatprep.subr.mxu0 0.0
      %1645 = vmatpush1.msra.mxu0 0.0
      %1646 = vmatprep.subr.mxu0 0.0
      %1647 = vmatpush1.msra.mxu0 0.0
      %1648 = vmatprep.subr.mxu0 0.0
      %1649 = vmatpush1.msra.mxu0 0.0
      %1650 = vmatprep.mubr.f32.mxu0 0.0
      %v1651 = vand.u32 %v1291, 4294901760
      %v1652 = vsub.f32 %v1291, %v1651
      %v1653 = vand.u32 %v1652, 4294901760
      %1654 = vmatmul.mubr.f32.gmra.mrb[0].mxu0 %v1653
      %v1655 = vpop.f32.mrb[0].mxu0
      %v1656 = vadd.f32 %v1574, %v1655
      %v1657 = vpop.f32.mrb[0].mxu0
      %v1658 = vadd.f32 %v1576, %v1657
      %1659 = vdwg.mxu0
      %v1660 = vand.u32 %v225, 4294901760
      %v1661 = vsub.f32 %v225, %v1660
      %v1662 = vand.u32 %v1661, 4294901760
      %1663 = vmatprep.subr.mxu0 %v1662
      %v1664 = vand.u32 %v224, 4294901760
      %v1665 = vsub.f32 %v224, %v1664
      %v1666 = vand.u32 %v1665, 4294901760
      %1667 = vmatpush1.msra.mxu0 %v1666
      %v1668 = vand.u32 %v227, 4294901760
      %v1669 = vsub.f32 %v227, %v1668
      %v1670 = vand.u32 %v1669, 4294901760
      %1671 = vmatprep.subr.mxu0 %v1670
      %v1672 = vand.u32 %v226, 4294901760
      %v1673 = vsub.f32 %v226, %v1672
      %v1674 = vand.u32 %v1673, 4294901760
      %1675 = vmatpush1.msra.mxu0 %v1674
      %v1676 = vand.u32 %v229, 4294901760
      %v1677 = vsub.f32 %v229, %v1676
      %v1678 = vand.u32 %v1677, 4294901760
      %1679 = vmatprep.subr.mxu0 %v1678
      %v1680 = vand.u32 %v228, 4294901760
      %v1681 = vsub.f32 %v228, %v1680
      %v1682 = vand.u32 %v1681, 4294901760
      %1683 = vmatpush1.msra.mxu0 %v1682
      %v1684 = vand.u32 %v231, 4294901760
      %v1685 = vsub.f32 %v231, %v1684
      %v1686 = vand.u32 %v1685, 4294901760
      %1687 = vmatprep.subr.mxu0 %v1686
      %v1688 = vand.u32 %v230, 4294901760
      %v1689 = vsub.f32 %v230, %v1688
      %v1690 = vand.u32 %v1689, 4294901760
      %1691 = vmatpush1.msra.mxu0 %v1690
      %1692 = vmatprep.subr.mxu0 0.0
      %1693 = vmatpush1.msra.mxu0 0.0
      %1694 = vmatprep.subr.mxu0 0.0
      %1695 = vmatpush1.msra.mxu0 0.0
      %1696 = vmatprep.subr.mxu0 0.0
      %1697 = vmatpush1.msra.mxu0 0.0
      %1698 = vmatprep.subr.mxu0 0.0
      %1699 = vmatpush1.msra.mxu0 0.0
      %1700 = vmatprep.subr.mxu0 0.0
      %1701 = vmatpush1.msra.mxu0 0.0
      %1702 = vmatprep.subr.mxu0 0.0
      %1703 = vmatpush1.msra.mxu0 0.0
      %1704 = vmatprep.subr.mxu0 0.0
      %1705 = vmatpush1.msra.mxu0 0.0
      %1706 = vmatprep.subr.mxu0 0.0
      %1707 = vmatpush1.msra.mxu0 0.0
      %1708 = vmatprep.subr.mxu0 0.0
      %1709 = vmatpush1.msra.mxu0 0.0
      %1710 = vmatprep.subr.mxu0 0.0
      %1711 = vmatpush1.msra.mxu0 0.0
      %1712 = vmatprep.subr.mxu0 0.0
      %1713 = vmatpush1.msra.mxu0 0.0
      %1714 = vmatprep.subr.mxu0 0.0
      %1715 = vmatpush1.msra.mxu0 0.0
      %1716 = vmatprep.subr.mxu0 0.0
      %1717 = vmatpush1.msra.mxu0 0.0
      %1718 = vmatprep.subr.mxu0 0.0
      %1719 = vmatpush1.msra.mxu0 0.0
      %1720 = vmatprep.subr.mxu0 0.0
      %1721 = vmatpush1.msra.mxu0 0.0
      %1722 = vmatprep.subr.mxu0 0.0
      %1723 = vmatpush1.msra.mxu0 0.0
      %1724 = vmatprep.subr.mxu0 0.0
      %1725 = vmatpush1.msra.mxu0 0.0
      %1726 = vmatprep.subr.mxu0 0.0
      %1727 = vmatpush1.msra.mxu0 0.0
      %1728 = vmatprep.subr.mxu0 0.0
      %1729 = vmatpush1.msra.mxu0 0.0
      %1730 = vmatprep.subr.mxu0 0.0
      %1731 = vmatpush1.msra.mxu0 0.0
      %1732 = vmatprep.subr.mxu0 0.0
      %1733 = vmatpush1.msra.mxu0 0.0
      %1734 = vmatprep.subr.mxu0 0.0
      %1735 = vmatpush1.msra.mxu0 0.0
      %1736 = vmatprep.subr.mxu0 0.0
      %1737 = vmatpush1.msra.mxu0 0.0
      %1738 = vmatprep.subr.mxu0 0.0
      %1739 = vmatpush1.msra.mxu0 0.0
      %1740 = vmatprep.subr.mxu0 0.0
      %1741 = vmatpush1.msra.mxu0 0.0
      %1742 = vmatprep.subr.mxu0 0.0
      %1743 = vmatpush1.msra.mxu0 0.0
      %1744 = vmatprep.subr.mxu0 0.0
      %1745 = vmatpush1.msra.mxu0 0.0
      %1746 = vmatprep.subr.mxu0 0.0
      %1747 = vmatpush1.msra.mxu0 0.0
      %1748 = vmatprep.mubr.f32.mxu0 0.0
      %v1749 = vand.u32 %v1291, 4294901760
      %1750 = vmatmul.mubr.f32.gmra.mrb[0].mxu0 %v1749
      %v1751 = vpop.f32.mrb[0].mxu0
      %v1752 = vadd.f32 %v1656, %v1751
      %v1753 = vpop.f32.mrb[0].mxu0
      %v1754 = vadd.f32 %v1658, %v1753
      %1755 = vdwg.mxu0
      %v1756 = vand.u32 %v225, 4294901760
      %1757 = vmatprep.subr.mxu0 %v1756
      %v1758 = vand.u32 %v224, 4294901760
      %1759 = vmatpush1.msra.mxu0 %v1758
      %v1760 = vand.u32 %v227, 4294901760
      %1761 = vmatprep.subr.mxu0 %v1760
      %v1762 = vand.u32 %v226, 4294901760
      %1763 = vmatpush1.msra.mxu0 %v1762
      %v1764 = vand.u32 %v229, 4294901760
      %1765 = vmatprep.subr.mxu0 %v1764
      %v1766 = vand.u32 %v228, 4294901760
      %1767 = vmatpush1.msra.mxu0 %v1766
      %v1768 = vand.u32 %v231, 4294901760
      %1769 = vmatprep.subr.mxu0 %v1768
      %v1770 = vand.u32 %v230, 4294901760
      %1771 = vmatpush1.msra.mxu0 %v1770
      %1772 = vmatprep.subr.mxu0 0.0
      %1773 = vmatpush1.msra.mxu0 0.0
      %1774 = vmatprep.subr.mxu0 0.0
      %1775 = vmatpush1.msra.mxu0 0.0
      %1776 = vmatprep.subr.mxu0 0.0
      %1777 = vmatpush1.msra.mxu0 0.0
      %1778 = vmatprep.subr.mxu0 0.0
      %1779 = vmatpush1.msra.mxu0 0.0
      %1780 = vmatprep.subr.mxu0 0.0
      %1781 = vmatpush1.msra.mxu0 0.0
      %1782 = vmatprep.subr.mxu0 0.0
      %1783 = vmatpush1.msra.mxu0 0.0
      %1784 = vmatprep.subr.mxu0 0.0
      %1785 = vmatpush1.msra.mxu0 0.0
      %1786 = vmatprep.subr.mxu0 0.0
      %1787 = vmatpush1.msra.mxu0 0.0
      %1788 = vmatprep.subr.mxu0 0.0
      %1789 = vmatpush1.msra.mxu0 0.0
      %1790 = vmatprep.subr.mxu0 0.0
      %1791 = vmatpush1.msra.mxu0 0.0
      %1792 = vmatprep.subr.mxu0 0.0
      %1793 = vmatpush1.msra.mxu0 0.0
      %1794 = vmatprep.subr.mxu0 0.0
      %1795 = vmatpush1.msra.mxu0 0.0
      %1796 = vmatprep.subr.mxu0 0.0
      %1797 = vmatpush1.msra.mxu0 0.0
      %1798 = vmatprep.subr.mxu0 0.0
      %1799 = vmatpush1.msra.mxu0 0.0
      %1800 = vmatprep.subr.mxu0 0.0
      %1801 = vmatpush1.msra.mxu0 0.0
      %1802 = vmatprep.subr.mxu0 0.0
      %1803 = vmatpush1.msra.mxu0 0.0
      %1804 = vmatprep.subr.mxu0 0.0
      %1805 = vmatpush1.msra.mxu0 0.0
      %1806 = vmatprep.subr.mxu0 0.0
      %1807 = vmatpush1.msra.mxu0 0.0
      %1808 = vmatprep.subr.mxu0 0.0
      %1809 = vmatpush1.msra.mxu0 0.0
      %1810 = vmatprep.subr.mxu0 0.0
      %1811 = vmatpush1.msra.mxu0 0.0
      %1812 = vmatprep.subr.mxu0 0.0
      %1813 = vmatpush1.msra.mxu0 0.0
      %1814 = vmatprep.subr.mxu0 0.0
      %1815 = vmatpush1.msra.mxu0 0.0
      %1816 = vmatprep.subr.mxu0 0.0
      %1817 = vmatpush1.msra.mxu0 0.0
      %1818 = vmatprep.subr.mxu0 0.0
      %1819 = vmatpush1.msra.mxu0 0.0
      %1820 = vmatprep.subr.mxu0 0.0
      %1821 = vmatpush1.msra.mxu0 0.0
      %1822 = vmatprep.subr.mxu0 0.0
      %1823 = vmatpush1.msra.mxu0 0.0
      %1824 = vmatprep.subr.mxu0 0.0
      %1825 = vmatpush1.msra.mxu0 0.0
      %1826 = vmatprep.subr.mxu0 0.0
      %1827 = vmatpush1.msra.mxu0 0.0
      %1828 = vmatprep.mubr.f32.mxu0 0.0
      %v1829 = vand.u32 %v1291, 4294901760
      %1830 = vmatmul.mubr.f32.gmra.mrb[0].mxu0 %v1829
      %v1831 = vpop.f32.mrb[0].mxu0
      %v1832 = vadd.f32 %v1752, %v1831
      %v1833 = vpop.f32.mrb[0].mxu0
      %v1834 = vadd.f32 %v1754, %v1833
      %1835 = vdwg.mxu0
      %v1838 = vcombine.low %v1832, %v1834
      %v1840 = vmul.f32 %v218, %v1838
      %v1842 = vcombine.high %v1840, %v1840
      %vm1844 = vcmask 1043456
      %v1845 = vsel %vm1844, %v1840, 0.0
      %v1846 = vrot.slane %v1845, 4
      %v1847 = vadd.f32 %v1845, %v1846
      %v1848 = vrot.slane %v1847, 2
      %v1849 = vadd.f32 %v1847, %v1848
      %v1850 = vrot.slane %v1849, 1
      %v1851 = vadd.f32 %v1849, %v1850
      %v1852 = vsel %vm1844, %v1842, 0.0
      %v1853 = vrot.slane %v1852, 4
      %v1854 = vadd.f32 %v1852, %v1853
      %v1855 = vrot.slane %v1854, 2
      %v1856 = vadd.f32 %v1854, %v1855
      %v1857 = vrot.slane %v1856, 1
      %v1858 = vadd.f32 %v1856, %v1857
      %v1859 = vxor.u32 %v1851, 2147483648
      %v1860 = vxor.u32 %v1858, 2147483648
      %v1861 = vmul.f32 %v1859, 1.442695
      %v1862 = vpow.pop %v1861
      %v1863 = vmul.f32 %v1860, 1.442695
      %v1864 = vpow.pop %v1863
      %v1865 = vadd.f32 %v1862, 1.0
      %v1866 = vadd.f32 %v1864, 1.0
      %v1867 = vrcp.pop %v1865
      %v1868 = vmul.f32 1.0, %v1867
      %v1869 = vrcp.pop %v1866
      %v1870 = vmul.f32 1.0, %v1869
      %v1871 = vsub.f32 1.0, %v1868
      %v1872 = vsub.f32 1.0, %v1870
      %v1873 = vmul.f32 %v1871, %v224
      %v1874 = vmul.f32 %v1872, %v225
      %v1875 = vmul.f32 %v1871, %v226
      %v1876 = vmul.f32 %v1872, %v227
      %v1877 = vmul.f32 %v1871, %v228
      %v1878 = vmul.f32 %v1872, %v229
      %v1879 = vmul.f32 %v1871, %v230
      %v1880 = vmul.f32 %v1872, %v231
      %1881 = vst [vmem:[%s217] sm:$0xff] %v1873
      %1882 = vst [vmem:[%s217 + $0x8] sm:$0xff] %v1874
      %1883 = vst [vmem:[%s217 + $0x10] sm:$0xff] %v1875
      %1884 = vst [vmem:[%s217 + $0x18] sm:$0xff] %v1876
      %1885 = vst [vmem:[%s217 + $0x20] sm:$0xff] %v1877
      %1886 = vst [vmem:[%s217 + $0x28] sm:$0xff] %v1878
      %1887 = vst [vmem:[%s217 + $0x30] sm:$0xff] %v1879
      %1888 = vst [vmem:[%s217 + $0x38] sm:$0xff] %v1880
      %p1889 = scmp.lt.s32.totalorder %s15, 1
      %s1890 = scalar_select %p1889, %s15, 1
      %s1891 = smul.addr %s1890, 8
      %s1892 = smul.addr %s1891, 8
      %s1893 = scalar_lea.vmem %s4, %s1892
      // Predicated region
      $region37: #{cmt_forward.1} parent=35 // pred_check
        %p1894 = pneg %p127
      $region38: #{cmt_forward.1} parent=35 // pred_check_branch
        %1896 = sbr.rel (%p1894) target = $region40
      $region39: #{cmt_forward.1} parent=35 // pred_region
        _
      $region40: #{cmt_forward.1} parent=35 // pred_fallthru
        _
    $region36: #{cmt_forward.1} parent=5 // pred_fallthru
      _
    %p1897 = scmp.le.s32.totalorder 2, %s10
    // Predicated region
    $region41: #{cmt_forward.1} parent=5 // pred_check
      %p1898 = pneg %p1897
    $region42: #{cmt_forward.1} parent=5 // pred_check_branch
      %1900 = sbr.rel (%p1898) target = $region44
    $region43: #{cmt_forward.1} parent=5 // pred_region
      %s1901 = ssub.s32 %s10, 2
      // Predicated region
      $region45: #{cmt_forward.1} parent=43 // pred_check
        %p1902 = pneg %p133
      $region46: #{cmt_forward.1} parent=43 // pred_check_branch
        %1904 = sbr.rel (%p1902) target = $region48
      $region47: #{cmt_forward.1} parent=43 // pred_region
        %p1905 = scmp.lt.s32.totalorder %s16, 1
        %s1906 = scalar_select %p1905, %s16, 1
        %s1907 = smul.addr %s1906, 8
        %s1908 = smul.addr %s1907, 8
        %s1909 = scalar_lea.vmem %s4, %s1908
      $region48: #{cmt_forward.1} parent=43 // pred_fallthru
        _
    $region44: #{cmt_forward.1} parent=5 // pred_fallthru
      _
  $region6: #{cmt_forward.1} parent=0 // loop_footer
    %s14 = sadd.s32 1, %s10
  $region7: #{cmt_forward.1} parent=0 // loop_footer_branch
    %9 = sbr.rel target = $region3
  $region8: #{cmt_forward.1} parent=0 // loop_exit
    _

</llo_original>
